<compile_context>
chip_gen: v6e
topology: v6e:2x2x1
jax: 0.10.0
libtpu: 0.0.40
codegen_flags: <defaults>
</compile_context>

<pallas_src>
import functools

import jax
import jax.numpy as jnp
from jax.experimental import pallas as pl
from jax.experimental.pallas import tpu as pltpu


def _round_up(a, m):
    return -(-a // m) * m


def _rd_loss_kernel(x_ref, xh_ref,
                    mu_ref, sig_ref, y_ref, z_ref,
                    mur_ref, sigr_ref, yr_ref, zr_ref,
                    out_ref, acc_ref, rate_sm, *,
                    rows, tm, needs_mask,
                    n_lat, n_hyp, n_lat_r, n_hyp_r,
                    inv_n_img, inv_batch):
    c = pl.program_id(0)            # core-split axis ("parallel")
    i = pl.program_id(1)            # streamed reduction axis ("arbitrary")
    nc = pl.num_programs(0)
    ns = pl.num_programs(1)

    # ---------------- init (per core slice) ----------------
    @pl.when(i == 0)
    def _init():
        acc_ref[...] = jnp.zeros_like(acc_ref)
        rate_sm[0] = 0.0
        rate_sm[1] = 0.0
        rate_sm[2] = 0.0
        rate_sm[3] = 0.0

    # ---------------- rate terms (overlapped with the image stream) ----------
    def masked_bits_sum(delta, n_valid):
        bits = -jnp.log2(jnp.abs(delta) + 1e-6)
        total = delta.shape[0] * delta.shape[1]
        if n_valid == total:                       # static: slab fully valid
            return jnp.sum(bits)
        full_rows = n_valid // delta.shape[1]
        rem = n_valid % delta.shape[1]
        r = jax.lax.broadcasted_iota(jnp.int32, delta.shape, 0)
        if rem == 0:
            mask = r < full_rows
        else:
            l = jax.lax.broadcasted_iota(jnp.int32, delta.shape, 1)
            mask = (r < full_rows) | ((r == full_rows) & (l < rem))
        return jnp.sum(jnp.where(mask, bits, 0.0))

    def gauss_rate(mu_r_, sig_r_, y_r_, n_valid):
        mu_v = mu_r_[...].astype(jnp.float32)
        sg_v = sig_r_[...].astype(jnp.float32)
        y_v = y_r_[...].astype(jnp.float32)
        inv = 1.0 / (jnp.float32(2.0 ** 0.5) * sg_v)
        delta = 0.5 * (jax.lax.erf((y_v + 0.5 - mu_v) * inv)
                       - jax.lax.erf((y_v - 0.5 - mu_v) * inv))
        return masked_bits_sum(delta, n_valid) * inv_batch

    def sigmoid_rate(z_r_, n_valid):
        zv = z_r_[...].astype(jnp.float32)
        delta = jax.nn.sigmoid(zv + 0.5) - jax.nn.sigmoid(zv - 0.5)
        return masked_bits_sum(delta, n_valid) * inv_batch

    # Core 0 does the (mu, sigma, y, z) pair, the last core does the *_r pair;
    # with a single core (nc == 1) both conditions hold and it does all four.
    @pl.when((i == 0) & (c == 0))
    def _rates_a():
        rate_sm[0] = gauss_rate(mu_ref, sig_ref, y_ref, n_lat)
        rate_sm[1] = sigmoid_rate(z_ref, n_hyp)

    @pl.when((i == 0) & (c == nc - 1))
    def _rates_b():
        rate_sm[2] = gauss_rate(mur_ref, sigr_ref, yr_ref, n_lat_r)
        rate_sm[3] = sigmoid_rate(zr_ref, n_hyp_r)

    # ---------------- streamed squared-error accumulation --------------------
    d = x_ref[...].astype(jnp.float32) - xh_ref[...].astype(jnp.float32)
    sq = d * d
    if needs_mask:
        # Global block index; rows beyond `rows` (tail padding / clamped
        # duplicate blocks) contribute exactly 0.
        gb = c * ns + i
        valid = rows - gb * tm
        r = jax.lax.broadcasted_iota(jnp.int32, sq.shape, 0)
        sq = jnp.where(r < valid, sq, 0.0)
    acc_ref[...] += sq

    # ---------------- per-core finalize: write partial-output row ------------
    @pl.when(i == ns - 1)
    def _finalize():
        dist_part = jnp.sum(acc_ref[...]) * inv_n_img
        row_i = jax.lax.broadcasted_iota(jnp.int32, (8, 128), 0)
        lane_i = jax.lax.broadcasted_iota(jnp.int32, (8, 128), 1)
        on_r0 = row_i == 0
        tile = jnp.where(on_r0 & (lane_i == 0), dist_part, 0.0)
        tile = jnp.where(on_r0 & (lane_i == 1), rate_sm[0], tile)
        tile = jnp.where(on_r0 & (lane_i == 2), rate_sm[1], tile)
        tile = jnp.where(on_r0 & (lane_i == 3), rate_sm[2], tile)
        tile = jnp.where(on_r0 & (lane_i == 4), rate_sm[3], tile)
        out_ref[...] = tile[None]


def rate_distortion_loss(x, x_hat, mu, sigma, y_hat, z,
                         mu_r, sigma_r, y_hat_r, z_r, lam,
                         *, tm=None, lanes=None):
    """Returns (loss, distortion, latent_rate, hyperlatent_rate,
                latent_rate_r, hyperlatent_rate_r) — all f32 scalars."""
    del lam  # constant_lambda: lam is returned unchanged by the module and is
    # not part of the module's return tuple.
    batch = int(x.shape[0])
    n_img = int(x.size)

    def sub_mult(dt):
        return {4: 8, 2: 16, 1: 32}.get(jnp.dtype(dt).itemsize, 8)

    sub = max(sub_mult(x.dtype), sub_mult(x_hat.dtype))

    # ---- image slabs: zero-copy ravel/reshape whenever numel % lanes == 0 ----
    if lanes is None:
        lanes = 512
        for cand in (1024, 512, 256, 128):
            if n_img % cand == 0:
                lanes = cand
                break
    if n_img % lanes == 0:
        rows = n_img // lanes
        x_s = jnp.ravel(x).reshape(rows, lanes)
        xh_s = jnp.ravel(x_hat).reshape(rows, lanes)
    else:
        # TODO(synk): fallback pad costs one extra HBM copy of x / x_hat; only
        # hit when numel(x) is not a multiple of 128.
        rows = -(-n_img // lanes)
        pad = rows * lanes - n_img
        x_s = jnp.pad(jnp.ravel(x), (0, pad)).reshape(rows, lanes)
        xh_s = jnp.pad(jnp.ravel(x_hat), (0, pad)).reshape(rows, lanes)

    # ---- tile size (~1 MiB f32 tiles) and 2-way core split ----
    if tm is None:
        tm = max(sub, (1 << 20) // (lanes * 4))
    nc = 2 if rows >= 2 * sub else 1
    tm_eff = max(sub, min(_round_up(tm, sub), _round_up(-(-rows // nc), sub)))
    nb = -(-rows // tm_eff)          # total image blocks
    ns = -(-nb // nc)                # blocks per core (reduction axis)
    needs_mask = (nc * ns * tm_eff != rows)

    # ---- small resident latent / hyperlatent slabs (padding masked in kernel)
    LAT_LANES = 512

    def slab(t, fill=0.0):
        flat = jnp.ravel(t).astype(jnp.float32)
        r = max(8, _round_up(-(-flat.size // LAT_LANES), 8))
        flat = jnp.pad(flat, (0, r * LAT_LANES - flat.size),
                       constant_values=fill)
        return flat.reshape(r, LAT_LANES)

    mu_s, sig_s, y_s = slab(mu), slab(sigma, 1.0), slab(y_hat)
    z_s = slab(z)
    mur_s, sigr_s, yr_s = slab(mu_r), slab(sigma_r, 1.0), slab(y_hat_r)
    zr_s = slab(z_r)

    img_spec = pl.BlockSpec(
        (tm_eff, lanes),
        lambda c, i: (jnp.minimum(c * ns + i, nb - 1), 0))

    def resident(s):
        return pl.BlockSpec(s.shape, lambda c, i: (0, 0))

    kernel = functools.partial(
        _rd_loss_kernel,
        rows=rows, tm=tm_eff, needs_mask=needs_mask,
        n_lat=int(mu.size), n_hyp=int(z.size),
        n_lat_r=int(mu_r.size), n_hyp_r=int(z_r.size),
        inv_n_img=1.0 / n_img, inv_batch=1.0 / batch)

    # VMEM budget: 2 image inputs x 2 buffers + f32 accumulator + resident
    # latents (double-buffered) + output block + headroom.
    lat_bytes = sum(int(s.size) * 4 for s in
                    (mu_s, sig_s, y_s, z_s, mur_s, sigr_s, yr_s, zr_s))
    vmem_needed = (4 * tm_eff * lanes * 4
                   + tm_eff * lanes * 4
                   + 2 * lat_bytes
                   + 2 * 8 * 128 * 4
                   + (2 << 20))
    vmem_limit = int(min(64 * 1024 * 1024, max(32 * 1024 * 1024, vmem_needed)))

    parts = pl.pallas_call(
        kernel,
        out_shape=jax.ShapeDtypeStruct((nc, 8, 128), jnp.float32),
        grid_spec=pltpu.PrefetchScalarGridSpec(
            num_scalar_prefetch=0,
            grid=(nc, ns),
            in_specs=[img_spec, img_spec,
                      resident(mu_s), resident(sig_s), resident(y_s),
                      resident(z_s),
                      resident(mur_s), resident(sigr_s), resident(yr_s),
                      resident(zr_s)],
            out_specs=pl.BlockSpec((1, 8, 128), lambda c, i: (c, 0, 0)),
            scratch_shapes=[pltpu.VMEM((tm_eff, lanes), jnp.float32),
                            pltpu.SMEM((4,), jnp.float32)]),
        compiler_params=pltpu.CompilerParams(
            dimension_semantics=("parallel", "arbitrary"),
            vmem_limit_bytes=vmem_limit),
    )(x_s, xh_s, mu_s, sig_s, y_s, z_s, mur_s, sigr_s, yr_s, zr_s)

    vals = jnp.sum(parts[:, 0, :], axis=0)      # combine per-core partials
    distortion = vals[0]
    latent_rate = vals[1]
    hyperlatent_rate = vals[2]
    latent_rate_r = vals[3]
    hyperlatent_rate_r = vals[4]
    loss = (distortion
            + latent_rate / 1e7 + hyperlatent_rate / 1e5
            + latent_rate_r / 1e7 + hyperlatent_rate_r / 1e5)
    # TODO(synk): the module's host-side print('out') / print('warn')
    # diagnostics have no effect on the returned values and are omitted.
    return (loss, distortion, latent_rate, hyperlatent_rate,
            latent_rate_r, hyperlatent_rate_r)


# ------------------------- pure-JAX reference (sanity check) -----------------
def _reference(x, x_hat, mu, sigma, y_hat, z, mu_r, sigma_r, y_hat_r, z_r):
    def cdf(mu_, sigma_, v):
        return 0.5 * (1.0 + jax.lax.erf((v - mu_) / (2.0 ** 0.5 * sigma_)))

    def latent_rate(mu_, sigma_, y_):
        u = cdf(mu_, sigma_, y_ + 0.5)
        l = cdf(mu_, sigma_, y_ - 0.5)
        return jnp.mean(-jnp.sum(jnp.log2(jnp.abs(u - l) + 1e-6), axis=(1, 2, 3)))

    def hyper_rate(z_):
        u = jax.nn.sigmoid(z_ + 0.5)
        l = jax.nn.sigmoid(z_ - 0.5)
        return jnp.mean(-jnp.sum(jnp.log2(jnp.abs(u - l) + 1e-6), axis=(1, 2, 3)))

    distortion = jnp.mean((x - x_hat) ** 2)
    lr = latent_rate(mu, sigma, y_hat)
    hr = hyper_rate(z)
    lrr = latent_rate(mu_r, sigma_r, y_hat_r)
    hrr = hyper_rate(z_r)
    loss = distortion + lr / 1e7 + hr / 1e5 + lrr / 1e7 + hrr / 1e5
    return loss, distortion, lr, hr, lrr, hrr


if __name__ == "__main__":
    key = jax.random.PRNGKey(0)
    ks = jax.random.split(key, 10)

    B = 2
    x_shape = (B, 3, 64, 64)   # image        -> 24576 elems, zero-copy slab
    y_shape = (B, 8, 16, 16)   # latents      -> 4096 elems (resident)
    z_shape = (B, 4, 8, 8)     # hyperlatents -> 512 elems  (resident)

    x       = jax.random.normal(ks[0], x_shape, jnp.float32)
    x_hat   = x + 0.05 * jax.random.normal(ks[1], x_shape, jnp.float32)
    mu      = jax.random.normal(ks[2], y_shape, jnp.float32)
    sigma   = jax.random.uniform(ks[3], y_shape, jnp.float32, 0.2, 1.5)
    y_hat   = jax.random.normal(ks[4], y_shape, jnp.float32)
    z       = jax.random.normal(ks[5], z_shape, jnp.float32)
    mu_r    = jax.random.normal(ks[6], y_shape, jnp.float32)
    sigma_r = jax.random.uniform(ks[7], y_shape, jnp.float32, 0.2, 1.5)
    y_hat_r = jax.random.normal(ks[8], y_shape, jnp.float32)
    z_r     = jax.random.normal(ks[9], z_shape, jnp.float32)
    lam     = jnp.float32(0.01)

    outs = rate_distortion_loss(x, x_hat, mu, sigma, y_hat, z,
                                mu_r, sigma_r, y_hat_r, z_r, lam)
    outs = [jax.block_until_ready(o) for o in outs]

    refs = _reference(x, x_hat, mu, sigma, y_hat, z,
                      mu_r, sigma_r, y_hat_r, z_r)

    # rtol covers small erf/log2 lowering differences between Mosaic and XLA,
    # amplified by log2 near the Gaussian CDF tails.
    for got, want in zip(outs, refs):
        assert jnp.allclose(got, want, rtol=5e-3, atol=1e-3), (got, want)

    print("KERNEL_OK")
</pallas_src>

<mosaic_0001>
module attributes {stable_mosaic.version = 11 : i64} {
  func.func @_rd_loss_kernel(%arg0: i32, %arg1: i32, %arg2: memref<16x1024xf32, #tpu.memory_space<vmem>>, %arg3: memref<16x1024xf32, #tpu.memory_space<vmem>>, %arg4: memref<8x512xf32, #tpu.memory_space<vmem>>, %arg5: memref<8x512xf32, #tpu.memory_space<vmem>>, %arg6: memref<8x512xf32, #tpu.memory_space<vmem>>, %arg7: memref<8x512xf32, #tpu.memory_space<vmem>>, %arg8: memref<8x512xf32, #tpu.memory_space<vmem>>, %arg9: memref<8x512xf32, #tpu.memory_space<vmem>>, %arg10: memref<8x512xf32, #tpu.memory_space<vmem>>, %arg11: memref<8x512xf32, #tpu.memory_space<vmem>>, %arg12: memref<1x8x128xf32, #tpu.memory_space<vmem>>, %arg13: memref<16x1024xf32, #tpu.memory_space<vmem>>, %arg14: memref<4xf32, #tpu.memory_space<smem>>) attributes {dimension_semantics = [#tpu.dimension_semantics<parallel>, #tpu.dimension_semantics<arbitrary>], iteration_bounds = array<i64: 2, 1>, scalar_prefetch = 0 : i64, scratch_operands = 2 : i64, tpu.core_type = #tpu.core_type<tc>, window_params = [{transform_indices = @transform_0, window_bounds = array<i64: 16, 1024>}, {transform_indices = @transform_1, window_bounds = array<i64: 16, 1024>}, {pipeline_mode = #tpu.pipeline_mode<synchronous>, transform_indices = @transform_2, window_bounds = array<i64: 8, 512>}, {pipeline_mode = #tpu.pipeline_mode<synchronous>, transform_indices = @transform_3, window_bounds = array<i64: 8, 512>}, {pipeline_mode = #tpu.pipeline_mode<synchronous>, transform_indices = @transform_4, window_bounds = array<i64: 8, 512>}, {pipeline_mode = #tpu.pipeline_mode<synchronous>, transform_indices = @transform_5, window_bounds = array<i64: 8, 512>}, {pipeline_mode = #tpu.pipeline_mode<synchronous>, transform_indices = @transform_6, window_bounds = array<i64: 8, 512>}, {pipeline_mode = #tpu.pipeline_mode<synchronous>, transform_indices = @transform_7, window_bounds = array<i64: 8, 512>}, {pipeline_mode = #tpu.pipeline_mode<synchronous>, transform_indices = @transform_8, window_bounds = array<i64: 8, 512>}, {pipeline_mode = #tpu.pipeline_mode<synchronous>, transform_indices = @transform_9, window_bounds = array<i64: 8, 512>}, {transform_indices = @transform_10, window_bounds = array<i64: 1, 8, 128>}]} {
    %c0_i32 = arith.constant 0 : i32
    %0 = arith.cmpi eq, %arg1, %c0_i32 : i32
    %1 = arith.extui %0 : i1 to i32
    %c0_i32_0 = arith.constant 0 : i32
    %2 = arith.cmpi ne, %1, %c0_i32_0 : i32
    scf.if %2 {
      %cst_16 = arith.constant 0.000000e+00 : f32
      %32 = vector.broadcast %cst_16 : f32 to vector<16x1024xf32>
      %c0_17 = arith.constant 0 : index
      %c0_18 = arith.constant 0 : index
      %33 = vector.load %arg13[%c0_17, %c0_18] : memref<16x1024xf32, #tpu.memory_space<vmem>>, vector<16x1024xf32>
      tpu.vector_store %arg13[%c0_17, %c0_18], %32 {strides = array<i32>} : memref<16x1024xf32, #tpu.memory_space<vmem>>, vector<16x1024xf32>,
      %cst_19 = arith.constant 0.000000e+00 : f32
      %c0_20 = arith.constant 0 : index
      %34 = memref.load %arg14[%c0_20] : memref<4xf32, #tpu.memory_space<smem>>
      memref.store %cst_19, %arg14[%c0_20] : memref<4xf32, #tpu.memory_space<smem>>
      %cst_21 = arith.constant 0.000000e+00 : f32
      %c1 = arith.constant 1 : index
      %35 = memref.load %arg14[%c1] : memref<4xf32, #tpu.memory_space<smem>>
      memref.store %cst_21, %arg14[%c1] : memref<4xf32, #tpu.memory_space<smem>>
      %cst_22 = arith.constant 0.000000e+00 : f32
      %c2 = arith.constant 2 : index
      %36 = memref.load %arg14[%c2] : memref<4xf32, #tpu.memory_space<smem>>
      memref.store %cst_22, %arg14[%c2] : memref<4xf32, #tpu.memory_space<smem>>
      %cst_23 = arith.constant 0.000000e+00 : f32
      %c3 = arith.constant 3 : index
      %37 = memref.load %arg14[%c3] : memref<4xf32, #tpu.memory_space<smem>>
      memref.store %cst_23, %arg14[%c3] : memref<4xf32, #tpu.memory_space<smem>>
    } else {
    }
    %c0_i32_1 = arith.constant 0 : i32
    %3 = arith.cmpi eq, %arg1, %c0_i32_1 : i32
    %c0_i32_2 = arith.constant 0 : i32
    %4 = arith.cmpi eq, %arg0, %c0_i32_2 : i32
    %5 = arith.andi %3, %4 : i1
    %6 = arith.extui %5 : i1 to i32
    %c0_i32_3 = arith.constant 0 : i32
    %7 = arith.cmpi ne, %6, %c0_i32_3 : i32
    scf.if %7 {
      %c0_16 = arith.constant 0 : index
      %c0_17 = arith.constant 0 : index
      %32 = vector.load %arg4[%c0_16, %c0_17] : memref<8x512xf32, #tpu.memory_space<vmem>>, vector<8x512xf32>
      %c0_18 = arith.constant 0 : index
      %c0_19 = arith.constant 0 : index
      %33 = vector.load %arg5[%c0_18, %c0_19] : memref<8x512xf32, #tpu.memory_space<vmem>>, vector<8x512xf32>
      %c0_20 = arith.constant 0 : index
      %c0_21 = arith.constant 0 : index
      %34 = vector.load %arg6[%c0_20, %c0_21] : memref<8x512xf32, #tpu.memory_space<vmem>>, vector<8x512xf32>
      %cst_22 = arith.constant 1.41421354 : f32
      %35 = vector.broadcast %cst_22 : f32 to vector<8x512xf32>
      %36 = arith.mulf %35, %33 : vector<8x512xf32>
      %cst_23 = arith.constant 1.000000e+00 : f32
      %37 = vector.broadcast %cst_23 : f32 to vector<8x512xf32>
      %38 = arith.divf %37, %36 : vector<8x512xf32>
      %cst_24 = arith.constant 5.000000e-01 : f32
      %39 = vector.broadcast %cst_24 : f32 to vector<8x512xf32>
      %40 = arith.addf %34, %39 : vector<8x512xf32>
      %41 = arith.subf %40, %32 : vector<8x512xf32>
      %42 = arith.mulf %41, %38 : vector<8x512xf32>
      %43 = math.erf %42 : vector<8x512xf32>
      %cst_25 = arith.constant 5.000000e-01 : f32
      %44 = vector.broadcast %cst_25 : f32 to vector<8x512xf32>
      %45 = arith.subf %34, %44 : vector<8x512xf32>
      %46 = arith.subf %45, %32 : vector<8x512xf32>
      %47 = arith.mulf %46, %38 : vector<8x512xf32>
      %48 = math.erf %47 : vector<8x512xf32>
      %49 = arith.subf %43, %48 : vector<8x512xf32>
      %cst_26 = arith.constant 5.000000e-01 : f32
      %50 = vector.broadcast %cst_26 : f32 to vector<8x512xf32>
      %51 = arith.mulf %50, %49 : vector<8x512xf32>
      %52 = math.absf %51 : vector<8x512xf32>
      %cst_27 = arith.constant 9.99999997E-7 : f32
      %53 = vector.broadcast %cst_27 : f32 to vector<8x512xf32>
      %54 = arith.addf %52, %53 : vector<8x512xf32>
      %55 = math.log %54 : vector<8x512xf32>
      %cst_28 = arith.constant 2.000000e+00 : f32
      %56 = math.log %cst_28 : f32
      %57 = vector.broadcast %56 : f32 to vector<8x512xf32>
      %58 = arith.divf %55, %57 : vector<8x512xf32>
      %cst_29 = arith.constant 0.000000e+00 : f32
      %59 = vector.broadcast %cst_29 : f32 to vector<8x512xf32>
      %60 = arith.subf %59, %58 : vector<8x512xf32>
      %61 = vector.shape_cast %60 : vector<8x512xf32> to vector<1x8x512xf32>
      %cst_30 = arith.constant dense<0.000000e+00> : vector<1xf32>
      %62 = vector.multi_reduction <add>, %61, %cst_30 [1, 2] : vector<1x8x512xf32> to vector<1xf32>
      %63 = vector.shape_cast %62 : vector<1xf32> to vector<1x1x1xf32>
      %64 = vector.extract %63[0, 0, 0] : f32 from vector<1x1x1xf32>
      %cst_31 = arith.constant 5.000000e-01 : f32
      %65 = arith.mulf %64, %cst_31 : f32
      %c0_32 = arith.constant 0 : index
      %66 = memref.load %arg14[%c0_32] : memref<4xf32, #tpu.memory_space<smem>>
      memref.store %65, %arg14[%c0_32] : memref<4xf32, #tpu.memory_space<smem>>
      %c0_33 = arith.constant 0 : index
      %c0_34 = arith.constant 0 : index
      %67 = vector.load %arg7[%c0_33, %c0_34] : memref<8x512xf32, #tpu.memory_space<vmem>>, vector<8x512xf32>
      %cst_35 = arith.constant 5.000000e-01 : f32
      %68 = vector.broadcast %cst_35 : f32 to vector<8x512xf32>
      %69 = arith.addf %67, %68 : vector<8x512xf32>
      %70 = arith.negf %69 : vector<8x512xf32>
      %71 = math.exp %70 : vector<8x512xf32>
      %cst_36 = arith.constant 1.000000e+00 : f32
      %72 = vector.broadcast %cst_36 : f32 to vector<8x512xf32>
      %73 = arith.addf %72, %71 : vector<8x512xf32>
      %74 = arith.divf %72, %73 : vector<8x512xf32>
      %cst_37 = arith.constant 5.000000e-01 : f32
      %75 = vector.broadcast %cst_37 : f32 to vector<8x512xf32>
      %76 = arith.subf %67, %75 : vector<8x512xf32>
      %77 = arith.negf %76 : vector<8x512xf32>
      %78 = math.exp %77 : vector<8x512xf32>
      %cst_38 = arith.constant 1.000000e+00 : f32
      %79 = vector.broadcast %cst_38 : f32 to vector<8x512xf32>
      %80 = arith.addf %79, %78 : vector<8x512xf32>
      %81 = arith.divf %79, %80 : vector<8x512xf32>
      %82 = arith.subf %74, %81 : vector<8x512xf32>
      %83 = math.absf %82 : vector<8x512xf32>
      %cst_39 = arith.constant 9.99999997E-7 : f32
      %84 = vector.broadcast %cst_39 : f32 to vector<8x512xf32>
      %85 = arith.addf %83, %84 : vector<8x512xf32>
      %86 = math.log %85 : vector<8x512xf32>
      %cst_40 = arith.constant 2.000000e+00 : f32
      %87 = math.log %cst_40 : f32
      %88 = vector.broadcast %87 : f32 to vector<8x512xf32>
      %89 = arith.divf %86, %88 : vector<8x512xf32>
      %cst_41 = arith.constant 0.000000e+00 : f32
      %90 = vector.broadcast %cst_41 : f32 to vector<8x512xf32>
      %91 = arith.subf %90, %89 : vector<8x512xf32>
      %92 = tpu.iota {dimensions = array<i32: 0>} : vector<8x512xi32>
      %c1_i32_42 = arith.constant 1 : i32
      %93 = vector.broadcast %c1_i32_42 : i32 to vector<8x512xi32>
      %94 = arith.cmpi slt, %92, %93 : vector<8x512xi32>
      %cst_43 = arith.constant 0.000000e+00 : f32
      %95 = vector.broadcast %cst_43 : f32 to vector<8x512xf32>
      %96 = arith.select %94, %91, %95 : vector<8x512xi1>, vector<8x512xf32>
      %97 = vector.shape_cast %96 : vector<8x512xf32> to vector<1x8x512xf32>
      %cst_44 = arith.constant dense<0.000000e+00> : vector<1xf32>
      %98 = vector.multi_reduction <add>, %97, %cst_44 [1, 2] : vector<1x8x512xf32> to vector<1xf32>
      %99 = vector.shape_cast %98 : vector<1xf32> to vector<1x1x1xf32>
      %100 = vector.extract %99[0, 0, 0] : f32 from vector<1x1x1xf32>
      %cst_45 = arith.constant 5.000000e-01 : f32
      %101 = arith.mulf %100, %cst_45 : f32
      %c1 = arith.constant 1 : index
      %102 = memref.load %arg14[%c1] : memref<4xf32, #tpu.memory_space<smem>>
      memref.store %101, %arg14[%c1] : memref<4xf32, #tpu.memory_space<smem>>
    } else {
    }
    %c0_i32_4 = arith.constant 0 : i32
    %8 = arith.cmpi eq, %arg1, %c0_i32_4 : i32
    %c1_i32 = arith.constant 1 : i32
    %9 = arith.cmpi eq, %arg0, %c1_i32 : i32
    %10 = arith.andi %8, %9 : i1
    %11 = arith.extui %10 : i1 to i32
    %c0_i32_5 = arith.constant 0 : i32
    %12 = arith.cmpi ne, %11, %c0_i32_5 : i32
    scf.if %12 {
      %c0_16 = arith.constant 0 : index
      %c0_17 = arith.constant 0 : index
      %32 = vector.load %arg8[%c0_16, %c0_17] : memref<8x512xf32, #tpu.memory_space<vmem>>, vector<8x512xf32>
      %c0_18 = arith.constant 0 : index
      %c0_19 = arith.constant 0 : index
      %33 = vector.load %arg9[%c0_18, %c0_19] : memref<8x512xf32, #tpu.memory_space<vmem>>, vector<8x512xf32>
      %c0_20 = arith.constant 0 : index
      %c0_21 = arith.constant 0 : index
      %34 = vector.load %arg10[%c0_20, %c0_21] : memref<8x512xf32, #tpu.memory_space<vmem>>, vector<8x512xf32>
      %cst_22 = arith.constant 1.41421354 : f32
      %35 = vector.broadcast %cst_22 : f32 to vector<8x512xf32>
      %36 = arith.mulf %35, %33 : vector<8x512xf32>
      %cst_23 = arith.constant 1.000000e+00 : f32
      %37 = vector.broadcast %cst_23 : f32 to vector<8x512xf32>
      %38 = arith.divf %37, %36 : vector<8x512xf32>
      %cst_24 = arith.constant 5.000000e-01 : f32
      %39 = vector.broadcast %cst_24 : f32 to vector<8x512xf32>
      %40 = arith.addf %34, %39 : vector<8x512xf32>
      %41 = arith.subf %40, %32 : vector<8x512xf32>
      %42 = arith.mulf %41, %38 : vector<8x512xf32>
      %43 = math.erf %42 : vector<8x512xf32>
      %cst_25 = arith.constant 5.000000e-01 : f32
      %44 = vector.broadcast %cst_25 : f32 to vector<8x512xf32>
      %45 = arith.subf %34, %44 : vector<8x512xf32>
      %46 = arith.subf %45, %32 : vector<8x512xf32>
      %47 = arith.mulf %46, %38 : vector<8x512xf32>
      %48 = math.erf %47 : vector<8x512xf32>
      %49 = arith.subf %43, %48 : vector<8x512xf32>
      %cst_26 = arith.constant 5.000000e-01 : f32
      %50 = vector.broadcast %cst_26 : f32 to vector<8x512xf32>
      %51 = arith.mulf %50, %49 : vector<8x512xf32>
      %52 = math.absf %51 : vector<8x512xf32>
      %cst_27 = arith.constant 9.99999997E-7 : f32
      %53 = vector.broadcast %cst_27 : f32 to vector<8x512xf32>
      %54 = arith.addf %52, %53 : vector<8x512xf32>
      %55 = math.log %54 : vector<8x512xf32>
      %cst_28 = arith.constant 2.000000e+00 : f32
      %56 = math.log %cst_28 : f32
      %57 = vector.broadcast %56 : f32 to vector<8x512xf32>
      %58 = arith.divf %55, %57 : vector<8x512xf32>
      %cst_29 = arith.constant 0.000000e+00 : f32
      %59 = vector.broadcast %cst_29 : f32 to vector<8x512xf32>
      %60 = arith.subf %59, %58 : vector<8x512xf32>
      %61 = vector.shape_cast %60 : vector<8x512xf32> to vector<1x8x512xf32>
      %cst_30 = arith.constant dense<0.000000e+00> : vector<1xf32>
      %62 = vector.multi_reduction <add>, %61, %cst_30 [1, 2] : vector<1x8x512xf32> to vector<1xf32>
      %63 = vector.shape_cast %62 : vector<1xf32> to vector<1x1x1xf32>
      %64 = vector.extract %63[0, 0, 0] : f32 from vector<1x1x1xf32>
      %cst_31 = arith.constant 5.000000e-01 : f32
      %65 = arith.mulf %64, %cst_31 : f32
      %c2 = arith.constant 2 : index
      %66 = memref.load %arg14[%c2] : memref<4xf32, #tpu.memory_space<smem>>
      memref.store %65, %arg14[%c2] : memref<4xf32, #tpu.memory_space<smem>>
      %c0_32 = arith.constant 0 : index
      %c0_33 = arith.constant 0 : index
      %67 = vector.load %arg11[%c0_32, %c0_33] : memref<8x512xf32, #tpu.memory_space<vmem>>, vector<8x512xf32>
      %cst_34 = arith.constant 5.000000e-01 : f32
      %68 = vector.broadcast %cst_34 : f32 to vector<8x512xf32>
      %69 = arith.addf %67, %68 : vector<8x512xf32>
      %70 = arith.negf %69 : vector<8x512xf32>
      %71 = math.exp %70 : vector<8x512xf32>
      %cst_35 = arith.constant 1.000000e+00 : f32
      %72 = vector.broadcast %cst_35 : f32 to vector<8x512xf32>
      %73 = arith.addf %72, %71 : vector<8x512xf32>
      %74 = arith.divf %72, %73 : vector<8x512xf32>
      %cst_36 = arith.constant 5.000000e-01 : f32
      %75 = vector.broadcast %cst_36 : f32 to vector<8x512xf32>
      %76 = arith.subf %67, %75 : vector<8x512xf32>
      %77 = arith.negf %76 : vector<8x512xf32>
      %78 = math.exp %77 : vector<8x512xf32>
      %cst_37 = arith.constant 1.000000e+00 : f32
      %79 = vector.broadcast %cst_37 : f32 to vector<8x512xf32>
      %80 = arith.addf %79, %78 : vector<8x512xf32>
      %81 = arith.divf %79, %80 : vector<8x512xf32>
      %82 = arith.subf %74, %81 : vector<8x512xf32>
      %83 = math.absf %82 : vector<8x512xf32>
      %cst_38 = arith.constant 9.99999997E-7 : f32
      %84 = vector.broadcast %cst_38 : f32 to vector<8x512xf32>
      %85 = arith.addf %83, %84 : vector<8x512xf32>
      %86 = math.log %85 : vector<8x512xf32>
      %cst_39 = arith.constant 2.000000e+00 : f32
      %87 = math.log %cst_39 : f32
      %88 = vector.broadcast %87 : f32 to vector<8x512xf32>
      %89 = arith.divf %86, %88 : vector<8x512xf32>
      %cst_40 = arith.constant 0.000000e+00 : f32
      %90 = vector.broadcast %cst_40 : f32 to vector<8x512xf32>
      %91 = arith.subf %90, %89 : vector<8x512xf32>
      %92 = tpu.iota {dimensions = array<i32: 0>} : vector<8x512xi32>
      %c1_i32_41 = arith.constant 1 : i32
      %93 = vector.broadcast %c1_i32_41 : i32 to vector<8x512xi32>
      %94 = arith.cmpi slt, %92, %93 : vector<8x512xi32>
      %cst_42 = arith.constant 0.000000e+00 : f32
      %95 = vector.broadcast %cst_42 : f32 to vector<8x512xf32>
      %96 = arith.select %94, %91, %95 : vector<8x512xi1>, vector<8x512xf32>
      %97 = vector.shape_cast %96 : vector<8x512xf32> to vector<1x8x512xf32>
      %cst_43 = arith.constant dense<0.000000e+00> : vector<1xf32>
      %98 = vector.multi_reduction <add>, %97, %cst_43 [1, 2] : vector<1x8x512xf32> to vector<1xf32>
      %99 = vector.shape_cast %98 : vector<1xf32> to vector<1x1x1xf32>
      %100 = vector.extract %99[0, 0, 0] : f32 from vector<1x1x1xf32>
      %cst_44 = arith.constant 5.000000e-01 : f32
      %101 = arith.mulf %100, %cst_44 : f32
      %c3 = arith.constant 3 : index
      %102 = memref.load %arg14[%c3] : memref<4xf32, #tpu.memory_space<smem>>
      memref.store %101, %arg14[%c3] : memref<4xf32, #tpu.memory_space<smem>>
    } else {
    }
    %c0 = arith.constant 0 : index
    %c0_6 = arith.constant 0 : index
    %13 = vector.load %arg2[%c0, %c0_6] : memref<16x1024xf32, #tpu.memory_space<vmem>>, vector<16x1024xf32>
    %c0_7 = arith.constant 0 : index
    %c0_8 = arith.constant 0 : index
    %14 = vector.load %arg3[%c0_7, %c0_8] : memref<16x1024xf32, #tpu.memory_space<vmem>>, vector<16x1024xf32>
    %15 = arith.subf %13, %14 : vector<16x1024xf32>
    %16 = arith.mulf %15, %15 : vector<16x1024xf32>
    %c1_i32_9 = arith.constant 1 : i32
    %17 = arith.muli %arg0, %c1_i32_9 : i32
    %18 = arith.addi %17, %arg1 : i32
    %c16_i32 = arith.constant 16 : i32
    %19 = arith.muli %18, %c16_i32 : i32
    %c24_i32 = arith.constant 24 : i32
    %20 = arith.subi %c24_i32, %19 : i32
    %21 = tpu.iota {dimensions = array<i32: 0>} : vector<16x1024xi32>
    %22 = vector.broadcast %20 : i32 to vector<16x1024xi32>
    %23 = arith.cmpi slt, %21, %22 : vector<16x1024xi32>
    %cst = arith.constant 0.000000e+00 : f32
    %24 = vector.broadcast %cst : f32 to vector<16x1024xf32>
    %25 = arith.select %23, %16, %24 : vector<16x1024xi1>, vector<16x1024xf32>
    %c0_10 = arith.constant 0 : index
    %c0_11 = arith.constant 0 : index
    %26 = vector.load %arg13[%c0_10, %c0_11] : memref<16x1024xf32, #tpu.memory_space<vmem>>, vector<16x1024xf32>
    %27 = arith.addf %26, %25 : vector<16x1024xf32>
    %c0_12 = arith.constant 0 : index
    %c0_13 = arith.constant 0 : index
    %28 = vector.load %arg13[%c0_12, %c0_13] : memref<16x1024xf32, #tpu.memory_space<vmem>>, vector<16x1024xf32>
    tpu.vector_store %arg13[%c0_12, %c0_13], %27 {strides = array<i32>} : memref<16x1024xf32, #tpu.memory_space<vmem>>, vector<16x1024xf32>,
    %c0_i32_14 = arith.constant 0 : i32
    %29 = arith.cmpi eq, %arg1, %c0_i32_14 : i32
    %30 = arith.extui %29 : i1 to i32
    %c0_i32_15 = arith.constant 0 : i32
    %31 = arith.cmpi ne, %30, %c0_i32_15 : i32
    scf.if %31 {
      %c0_16 = arith.constant 0 : index
      %c0_17 = arith.constant 0 : index
      %32 = vector.load %arg13[%c0_16, %c0_17] : memref<16x1024xf32, #tpu.memory_space<vmem>>, vector<16x1024xf32>
      %33 = vector.shape_cast %32 : vector<16x1024xf32> to vector<1x16x1024xf32>
      %cst_18 = arith.constant dense<0.000000e+00> : vector<1xf32>
      %34 = vector.multi_reduction <add>, %33, %cst_18 [1, 2] : vector<1x16x1024xf32> to vector<1xf32>
      %35 = vector.shape_cast %34 : vector<1xf32> to vector<1x1x1xf32>
      %36 = vector.extract %35[0, 0, 0] : f32 from vector<1x1x1xf32>
      %cst_19 = arith.constant 4.06901054E-5 : f32
      %37 = arith.mulf %36, %cst_19 : f32
      %38 = tpu.iota {dimensions = array<i32: 0>} : vector<8x128xi32>
      %39 = tpu.iota {dimensions = array<i32: 1>} : vector<8x128xi32>
      %c0_i32_20 = arith.constant 0 : i32
      %40 = vector.broadcast %c0_i32_20 : i32 to vector<8x128xi32>
      %41 = arith.cmpi eq, %38, %40 : vector<8x128xi32>
      %c0_i32_21 = arith.constant 0 : i32
      %42 = vector.broadcast %c0_i32_21 : i32 to vector<8x128xi32>
      %43 = arith.cmpi eq, %39, %42 : vector<8x128xi32>
      %44 = arith.andi %41, %43 : vector<8x128xi1>
      %cst_22 = arith.constant 0.000000e+00 : f32
      %45 = vector.broadcast %37 : f32 to vector<8x128xf32>
      %46 = vector.broadcast %cst_22 : f32 to vector<8x128xf32>
      %47 = arith.select %44, %45, %46 : vector<8x128xi1>, vector<8x128xf32>
      %c1_i32_23 = arith.constant 1 : i32
      %48 = vector.broadcast %c1_i32_23 : i32 to vector<8x128xi32>
      %49 = arith.cmpi eq, %39, %48 : vector<8x128xi32>
      %50 = arith.andi %41, %49 : vector<8x128xi1>
      %c0_24 = arith.constant 0 : index
      %51 = memref.load %arg14[%c0_24] : memref<4xf32, #tpu.memory_space<smem>>
      %52 = vector.broadcast %51 : f32 to vector<8x128xf32>
      %53 = arith.select %50, %52, %47 : vector<8x128xi1>, vector<8x128xf32>
      %c2_i32 = arith.constant 2 : i32
      %54 = vector.broadcast %c2_i32 : i32 to vector<8x128xi32>
      %55 = arith.cmpi eq, %39, %54 : vector<8x128xi32>
      %56 = arith.andi %41, %55 : vector<8x128xi1>
      %c1 = arith.constant 1 : index
      %57 = memref.load %arg14[%c1] : memref<4xf32, #tpu.memory_space<smem>>
      %58 = vector.broadcast %57 : f32 to vector<8x128xf32>
      %59 = arith.select %56, %58, %53 : vector<8x128xi1>, vector<8x128xf32>
      %c3_i32 = arith.constant 3 : i32
      %60 = vector.broadcast %c3_i32 : i32 to vector<8x128xi32>
      %61 = arith.cmpi eq, %39, %60 : vector<8x128xi32>
      %62 = arith.andi %41, %61 : vector<8x128xi1>
      %c2 = arith.constant 2 : index
      %63 = memref.load %arg14[%c2] : memref<4xf32, #tpu.memory_space<smem>>
      %64 = vector.broadcast %63 : f32 to vector<8x128xf32>
      %65 = arith.select %62, %64, %59 : vector<8x128xi1>, vector<8x128xf32>
      %c4_i32 = arith.constant 4 : i32
      %66 = vector.broadcast %c4_i32 : i32 to vector<8x128xi32>
      %67 = arith.cmpi eq, %39, %66 : vector<8x128xi32>
      %68 = arith.andi %41, %67 : vector<8x128xi1>
      %c3 = arith.constant 3 : index
      %69 = memref.load %arg14[%c3] : memref<4xf32, #tpu.memory_space<smem>>
      %70 = vector.broadcast %69 : f32 to vector<8x128xf32>
      %71 = arith.select %68, %70, %65 : vector<8x128xi1>, vector<8x128xf32>
      %72 = vector.shape_cast %71 : vector<8x128xf32> to vector<1x8x128xf32>
      %c0_25 = arith.constant 0 : index
      %c0_26 = arith.constant 0 : index
      %c0_27 = arith.constant 0 : index
      %73 = vector.load %arg12[%c0_25, %c0_26, %c0_27] : memref<1x8x128xf32, #tpu.memory_space<vmem>>, vector<1x8x128xf32>
      tpu.vector_store %arg12[%c0_25, %c0_26, %c0_27], %72 {strides = array<i32>} : memref<1x8x128xf32, #tpu.memory_space<vmem>>, vector<1x8x128xf32>,
    } else {
    }
    return
  }
  func.func @transform_0(%arg0: i32, %arg1: i32) -> (i32, i32) {
    %c1_i32 = arith.constant 1 : i32
    %0 = arith.muli %arg0, %c1_i32 : i32
    %1 = arith.addi %0, %arg1 : i32
    %c1_i32_0 = arith.constant 1 : i32
    %2 = arith.minsi %1, %c1_i32_0 : i32
    %c0_i32 = arith.constant 0 : i32
    %c0_i32_1 = arith.constant 0 : i32
    return %2, %c0_i32 : i32, i32
  }
  func.func @transform_1(%arg0: i32, %arg1: i32) -> (i32, i32) {
    %c1_i32 = arith.constant 1 : i32
    %0 = arith.muli %arg0, %c1_i32 : i32
    %1 = arith.addi %0, %arg1 : i32
    %c1_i32_0 = arith.constant 1 : i32
    %2 = arith.minsi %1, %c1_i32_0 : i32
    %c0_i32 = arith.constant 0 : i32
    %c0_i32_1 = arith.constant 0 : i32
    return %2, %c0_i32 : i32, i32
  }
  func.func @transform_2(%arg0: i32, %arg1: i32) -> (i32, i32) {
    %c0_i32 = arith.constant 0 : i32
    %c0_i32_0 = arith.constant 0 : i32
    %c0_i32_1 = arith.constant 0 : i32
    return %c0_i32, %c0_i32_0 : i32, i32
  }
  func.func @transform_3(%arg0: i32, %arg1: i32) -> (i32, i32) {
    %c0_i32 = arith.constant 0 : i32
    %c0_i32_0 = arith.constant 0 : i32
    %c0_i32_1 = arith.constant 0 : i32
    return %c0_i32, %c0_i32_0 : i32, i32
  }
  func.func @transform_4(%arg0: i32, %arg1: i32) -> (i32, i32) {
    %c0_i32 = arith.constant 0 : i32
    %c0_i32_0 = arith.constant 0 : i32
    %c0_i32_1 = arith.constant 0 : i32
    return %c0_i32, %c0_i32_0 : i32, i32
  }
  func.func @transform_5(%arg0: i32, %arg1: i32) -> (i32, i32) {
    %c0_i32 = arith.constant 0 : i32
    %c0_i32_0 = arith.constant 0 : i32
    %c0_i32_1 = arith.constant 0 : i32
    return %c0_i32, %c0_i32_0 : i32, i32
  }
  func.func @transform_6(%arg0: i32, %arg1: i32) -> (i32, i32) {
    %c0_i32 = arith.constant 0 : i32
    %c0_i32_0 = arith.constant 0 : i32
    %c0_i32_1 = arith.constant 0 : i32
    return %c0_i32, %c0_i32_0 : i32, i32
  }
  func.func @transform_7(%arg0: i32, %arg1: i32) -> (i32, i32) {
    %c0_i32 = arith.constant 0 : i32
    %c0_i32_0 = arith.constant 0 : i32
    %c0_i32_1 = arith.constant 0 : i32
    return %c0_i32, %c0_i32_0 : i32, i32
  }
  func.func @transform_8(%arg0: i32, %arg1: i32) -> (i32, i32) {
    %c0_i32 = arith.constant 0 : i32
    %c0_i32_0 = arith.constant 0 : i32
    %c0_i32_1 = arith.constant 0 : i32
    return %c0_i32, %c0_i32_0 : i32, i32
  }
  func.func @transform_9(%arg0: i32, %arg1: i32) -> (i32, i32) {
    %c0_i32 = arith.constant 0 : i32
    %c0_i32_0 = arith.constant 0 : i32
    %c0_i32_1 = arith.constant 0 : i32
    return %c0_i32, %c0_i32_0 : i32, i32
  }
  func.func @transform_10(%arg0: i32, %arg1: i32) -> (i32, i32, i32) {
    %c0_i32 = arith.constant 0 : i32
    %c0_i32_0 = arith.constant 0 : i32
    %c0_i32_1 = arith.constant 0 : i32
    return %arg0, %c0_i32, %c0_i32_0 : i32, i32, i32
  }
}

</mosaic_0001>

<llo_original>
// kernel: tpu_custom_call.1
$region0: #{tpu_custom_call.1}
  #allocation0 [shape = 'u32[]', space=smem, size = 0x4, offset = 0x4, fixed_abs, tag = 'smem constant byte address 0x4 - core index']
  #allocation1 [shape = 'u32[144,128]{1,0:T(1,128)}', space=vmem, size = 0x12000, scoped, tag = 'internal scratch']
  #allocation2 [shape = 'f32[16,1024]{1,0:T(8,128)}', space=vmem, size = 0x10000, scoped, tag = 'scratch operand']
  #allocation3 [shape = 'f32[4]{0:T(128)}', space=smem, size = 0x200, scoped, tag = 'scratch operand']
  %s0 = inlined_call_operand.hbm [shape: f32[24,1024], index: 0, kind: input, shape index: {}]
  %s1 = inlined_call_operand.hbm [shape: f32[24,1024], index: 1, kind: input, shape index: {}]
  %s2 = inlined_call_operand.hbm [shape: f32[8,512], index: 2, kind: input, shape index: {}]
  %s3 = inlined_call_operand.hbm [shape: f32[8,512], index: 3, kind: input, shape index: {}]
  %s4 = inlined_call_operand.hbm [shape: f32[8,512], index: 4, kind: input, shape index: {}]
  %s5 = inlined_call_operand.hbm [shape: f32[8,512], index: 5, kind: input, shape index: {}]
  %s6 = inlined_call_operand.hbm [shape: f32[8,512], index: 6, kind: input, shape index: {}]
  %s7 = inlined_call_operand.hbm [shape: f32[8,512], index: 7, kind: input, shape index: {}]
  %s8 = inlined_call_operand.hbm [shape: f32[8,512], index: 8, kind: input, shape index: {}]
  %s9 = inlined_call_operand.hbm [shape: f32[8,512], index: 9, kind: input, shape index: {}]
  %s10 = inlined_call_operand.hbm [shape: f32[2,8,128], index: 10, kind: output, shape index: {}]
  %s11 = sld [smem:[#allocation0]]
  $region129: #{tpu_custom_call.1} parent=0
    _
  %s13 = ssub.s32 1, %s11
  %s14 = scalar_select 0, %s13, %s11
  $region1: #{tpu_custom_call.1} parent=0
    #allocation4 [shape = 'u8[131072]{0}', space=vmem, size = 0x20000, scoped, tag = 'input window, operand 0']
    #allocation5 [shape = 's32[2]{0}', space=sflag, size = 0x8, scoped, tag = 'scoped memory for tpu_custom_call.1']
    #allocation6 [shape = 's32[2]{0}', space=sflag, size = 0x8, scoped, tag = 'scoped memory for tpu_custom_call.1']
    #allocation7 [shape = 'u8[131072]{0}', space=vmem, size = 0x20000, scoped, tag = 'input window, operand 1']
    #allocation8 [shape = 's32[2]{0}', space=sflag, size = 0x8, scoped, tag = 'scoped memory for tpu_custom_call.1']
    #allocation9 [shape = 'u8[16384]{0}', space=vmem, size = 0x4000, scoped, tag = 'input window, operand 2, single buffered']
    #allocation10 [shape = 'u8[16384]{0}', space=vmem, size = 0x4000, scoped, tag = 'input window, operand 3, single buffered']
    #allocation11 [shape = 's32[1]{0}', space=sflag, size = 0x4, scoped, tag = 'scoped memory for tpu_custom_call.1']
    #allocation12 [shape = 'u8[16384]{0}', space=vmem, size = 0x4000, scoped, tag = 'input window, operand 4, single buffered']
    #allocation13 [shape = 'u8[16384]{0}', space=vmem, size = 0x4000, scoped, tag = 'input window, operand 5, single buffered']
    #allocation14 [shape = 's32[1]{0}', space=sflag, size = 0x4, scoped, tag = 'scoped memory for tpu_custom_call.1']
    #allocation15 [shape = 'u8[16384]{0}', space=vmem, size = 0x4000, scoped, tag = 'input window, operand 6, single buffered']
    #allocation16 [shape = 'u8[16384]{0}', space=vmem, size = 0x4000, scoped, tag = 'input window, operand 7, single buffered']
    #allocation17 [shape = 's32[1]{0}', space=sflag, size = 0x4, scoped, tag = 'scoped memory for tpu_custom_call.1']
    #allocation18 [shape = 'u8[16384]{0}', space=vmem, size = 0x4000, scoped, tag = 'input window, operand 8, single buffered']
    #allocation19 [shape = 'u8[16384]{0}', space=vmem, size = 0x4000, scoped, tag = 'input window, operand 9, single buffered']
    #allocation20 [shape = 's32[1]{0}', space=sflag, size = 0x4, scoped, tag = 'scoped memory for tpu_custom_call.1']
    #allocation21 [shape = 'u8[8192]{0}', space=vmem, size = 0x2000, scoped, tag = 'output window, operand 0']
    %15 = vsyncpa [#allocation5], 0
    %s16 = scalar_lea.sflag [#allocation5], 1
    %17 = vsyncpa %s16, 0
    %18 = vsyncpa [#allocation8], 0
    %s19 = scalar_lea.sflag [#allocation8], 1
    %20 = vsyncpa %s19, 0
    %21 = vsyncpa [#allocation11], 0
    %22 = vsyncpa [#allocation14], 0
    %23 = vsyncpa [#allocation17], 0
    %24 = vsyncpa [#allocation20], 0
    %25 = vsyncpa [#allocation6], 0
    %s26 = scalar_lea.sflag [#allocation6], 1
    %27 = vsyncpa %s26, 0
    loop: start=0, step=1, limit=4
    $region2: #{tpu_custom_call.1} parent=1 // loop_pre_header
      _
    $region3: #{tpu_custom_call.1} parent=1 // loop_header
      %s29 = sphi 0, %s33
      %p30 = scmp.ge.s32.totalorder %s29, 4
      %s36 = sphi 0, %s48
      %s37 = sphi 0, %s44
      %s38 = sphi 0, %s36
      %s39 = sphi 0, %s37
      %s40 = sphi 0, %s38
      %s41 = sphi 0, %s39
      %s57 = sphi 0, %s59
      %s60 = sphi 0, %s57
      %s61 = sphi 0, %s60
      %s77 = sphi 0, %s61
      %s89 = sphi 0, %s91
      %s92 = sphi 0, %s89
      %s93 = sphi 0, %s92
      %s109 = sphi 0, %s93
      %s113 = sphi 0, %s113
      %s115 = sphi 0, %s113
      %s116 = sphi 0, %s115
      %s130 = sphi 0, %s116
      %s134 = sphi 0, %s134
      %s136 = sphi 0, %s134
      %s137 = sphi 0, %s136
      %s151 = sphi 0, %s137
      %s155 = sphi 0, %s155
      %s157 = sphi 0, %s155
      %s158 = sphi 0, %s157
      %s172 = sphi 0, %s158
      %s176 = sphi 0, %s176
      %s178 = sphi 0, %s176
      %s179 = sphi 0, %s178
      %s193 = sphi 0, %s179
      %s197 = sphi 0, %s197
      %s199 = sphi 0, %s197
      %s200 = sphi 0, %s199
      %s214 = sphi 0, %s200
      %s218 = sphi 0, %s218
      %s220 = sphi 0, %s218
      %s221 = sphi 0, %s220
      %s235 = sphi 0, %s221
      %s239 = sphi 0, %s239
      %s241 = sphi 0, %s239
      %s242 = sphi 0, %s241
      %s256 = sphi 0, %s242
      %s260 = sphi 0, %s260
      %s262 = sphi 0, %s260
      %s263 = sphi 0, %s262
      %s277 = sphi 0, %s263
      %s283 = sphi 0, %s285
      %s286 = sphi 0, %s283
      %s287 = sphi 0, %s286
      %s303 = sphi 0, %s287
    $region4: #{tpu_custom_call.1} parent=1 // loop_header_branch
      %32 = sbr.rel (%p30) target = $region8
    $region5: #{tpu_custom_call.1} parent=1 // loop_body
      %s34 = ssub.s32 %s29, 1
      %s35 = ssub.s32 %s29, 2
      %s42 = sadd.s32 1, %s37
      %p43 = scmp.ge.s32.totalorder %s42, 1
      %s44 = scalar_select %p43, 0, %s42
      %s45 = sadd.s32 1, %s36
      %s46 = scalar_select %p43, %s45, %s36
      %p47 = scmp.ge.s32.totalorder %s46, 2
      %s48 = scalar_select %p47, 0, %s46
      %s49 = sadd.s32 %s36, %s37
      %p50 = scmp.lt.s32.totalorder %s49, 1
      %s51 = scalar_select %p50, %s49, 1
      %s52 = sadd.s32 %s48, %s44
      %p53 = scmp.lt.s32.totalorder %s52, 1
      %s54 = scalar_select %p53, %s52, 1
      %s55 = ssub.s32 %s51, %s54
      %p56 = scmp.eq.s32.totalorder %s55, 0
      %s58 = sadd.s32 %s57, 1
      %s59 = scalar_select %p56, %s57, %s58
      %p62 = pneg %p56
      %p63 = scmp.eq.s32.totalorder %s29, 1
      %p64 = por %p62, %p63
      %p65 = scmp.ne.s32.totalorder %s57, %s60
      %p66 = scmp.eq.s32.totalorder %s29, 0
      %p67 = por %p65, %p66
      %p68 = scmp.ne.s32.totalorder %s57, %s60
      %p69 = scmp.eq.s32.totalorder %s34, 1
      %p70 = por %p68, %p69
      %p71 = scmp.ne.s32.totalorder %s60, %s61
      %p72 = scmp.eq.s32.totalorder %s34, 0
      %p73 = por %p71, %p72
      %p74 = scmp.ne.s32.totalorder %s60, %s61
      %p75 = scmp.eq.s32.totalorder %s35, 1
      %p76 = por %p74, %p75
      %p78 = scmp.ne.s32.totalorder %s61, %s77
      %p79 = scmp.eq.s32.totalorder %s35, 0
      %p80 = por %p78, %p79
      %s81 = sadd.s32 %s36, %s37
      %p82 = scmp.lt.s32.totalorder %s81, 1
      %s83 = scalar_select %p82, %s81, 1
      %s84 = sadd.s32 %s48, %s44
      %p85 = scmp.lt.s32.totalorder %s84, 1
      %s86 = scalar_select %p85, %s84, 1
      %s87 = ssub.s32 %s83, %s86
      %p88 = scmp.eq.s32.totalorder %s87, 0
      %s90 = sadd.s32 %s89, 1
      %s91 = scalar_select %p88, %s89, %s90
      %p94 = pneg %p88
      %p95 = scmp.eq.s32.totalorder %s29, 1
      %p96 = por %p94, %p95
      %p97 = scmp.ne.s32.totalorder %s89, %s92
      %p98 = scmp.eq.s32.totalorder %s29, 0
      %p99 = por %p97, %p98
      %p100 = scmp.ne.s32.totalorder %s89, %s92
      %p101 = scmp.eq.s32.totalorder %s34, 1
      %p102 = por %p100, %p101
      %p103 = scmp.ne.s32.totalorder %s92, %s93
      %p104 = scmp.eq.s32.totalorder %s34, 0
      %p105 = por %p103, %p104
      %p106 = scmp.ne.s32.totalorder %s92, %s93
      %p107 = scmp.eq.s32.totalorder %s35, 1
      %p108 = por %p106, %p107
      %p110 = scmp.ne.s32.totalorder %s93, %s109
      %p111 = scmp.eq.s32.totalorder %s35, 0
      %p112 = por %p110, %p111
      %s114 = sadd.s32 %s113, 1
      %p117 = scmp.eq.s32.totalorder %s29, 1
      %p118 = scmp.ne.s32.totalorder %s113, %s115
      %p119 = scmp.eq.s32.totalorder %s29, 0
      %p120 = por %p118, %p119
      %p121 = scmp.ne.s32.totalorder %s113, %s115
      %p122 = scmp.eq.s32.totalorder %s34, 1
      %p123 = por %p121, %p122
      %p124 = scmp.ne.s32.totalorder %s115, %s116
      %p125 = scmp.eq.s32.totalorder %s34, 0
      %p126 = por %p124, %p125
      %p127 = scmp.ne.s32.totalorder %s115, %s116
      %p128 = scmp.eq.s32.totalorder %s35, 1
      %p129 = por %p127, %p128
      %p131 = scmp.ne.s32.totalorder %s116, %s130
      %p132 = scmp.eq.s32.totalorder %s35, 0
      %p133 = por %p131, %p132
      %s135 = sadd.s32 %s134, 1
      %p138 = scmp.eq.s32.totalorder %s29, 1
      %p139 = scmp.ne.s32.totalorder %s134, %s136
      %p140 = scmp.eq.s32.totalorder %s29, 0
      %p141 = por %p139, %p140
      %p142 = scmp.ne.s32.totalorder %s134, %s136
      %p143 = scmp.eq.s32.totalorder %s34, 1
      %p144 = por %p142, %p143
      %p145 = scmp.ne.s32.totalorder %s136, %s137
      %p146 = scmp.eq.s32.totalorder %s34, 0
      %p147 = por %p145, %p146
      %p148 = scmp.ne.s32.totalorder %s136, %s137
      %p149 = scmp.eq.s32.totalorder %s35, 1
      %p150 = por %p148, %p149
      %p152 = scmp.ne.s32.totalorder %s137, %s151
      %p153 = scmp.eq.s32.totalorder %s35, 0
      %p154 = por %p152, %p153
      %s156 = sadd.s32 %s155, 1
      %p159 = scmp.eq.s32.totalorder %s29, 1
      %p160 = scmp.ne.s32.totalorder %s155, %s157
      %p161 = scmp.eq.s32.totalorder %s29, 0
      %p162 = por %p160, %p161
      %p163 = scmp.ne.s32.totalorder %s155, %s157
      %p164 = scmp.eq.s32.totalorder %s34, 1
      %p165 = por %p163, %p164
      %p166 = scmp.ne.s32.totalorder %s157, %s158
      %p167 = scmp.eq.s32.totalorder %s34, 0
      %p168 = por %p166, %p167
      %p169 = scmp.ne.s32.totalorder %s157, %s158
      %p170 = scmp.eq.s32.totalorder %s35, 1
      %p171 = por %p169, %p170
      %p173 = scmp.ne.s32.totalorder %s158, %s172
      %p174 = scmp.eq.s32.totalorder %s35, 0
      %p175 = por %p173, %p174
      %s177 = sadd.s32 %s176, 1
      %p180 = scmp.eq.s32.totalorder %s29, 1
      %p181 = scmp.ne.s32.totalorder %s176, %s178
      %p182 = scmp.eq.s32.totalorder %s29, 0
      %p183 = por %p181, %p182
      %p184 = scmp.ne.s32.totalorder %s176, %s178
      %p185 = scmp.eq.s32.totalorder %s34, 1
      %p186 = por %p184, %p185
      %p187 = scmp.ne.s32.totalorder %s178, %s179
      %p188 = scmp.eq.s32.totalorder %s34, 0
      %p189 = por %p187, %p188
      %p190 = scmp.ne.s32.totalorder %s178, %s179
      %p191 = scmp.eq.s32.totalorder %s35, 1
      %p192 = por %p190, %p191
      %p194 = scmp.ne.s32.totalorder %s179, %s193
      %p195 = scmp.eq.s32.totalorder %s35, 0
      %p196 = por %p194, %p195
      %s198 = sadd.s32 %s197, 1
      %p201 = scmp.eq.s32.totalorder %s29, 1
      %p202 = scmp.ne.s32.totalorder %s197, %s199
      %p203 = scmp.eq.s32.totalorder %s29, 0
      %p204 = por %p202, %p203
      %p205 = scmp.ne.s32.totalorder %s197, %s199
      %p206 = scmp.eq.s32.totalorder %s34, 1
      %p207 = por %p205, %p206
      %p208 = scmp.ne.s32.totalorder %s199, %s200
      %p209 = scmp.eq.s32.totalorder %s34, 0
      %p210 = por %p208, %p209
      %p211 = scmp.ne.s32.totalorder %s199, %s200
      %p212 = scmp.eq.s32.totalorder %s35, 1
      %p213 = por %p211, %p212
      %p215 = scmp.ne.s32.totalorder %s200, %s214
      %p216 = scmp.eq.s32.totalorder %s35, 0
      %p217 = por %p215, %p216
      %s219 = sadd.s32 %s218, 1
      %p222 = scmp.eq.s32.totalorder %s29, 1
      %p223 = scmp.ne.s32.totalorder %s218, %s220
      %p224 = scmp.eq.s32.totalorder %s29, 0
      %p225 = por %p223, %p224
      %p226 = scmp.ne.s32.totalorder %s218, %s220
      %p227 = scmp.eq.s32.totalorder %s34, 1
      %p228 = por %p226, %p227
      %p229 = scmp.ne.s32.totalorder %s220, %s221
      %p230 = scmp.eq.s32.totalorder %s34, 0
      %p231 = por %p229, %p230
      %p232 = scmp.ne.s32.totalorder %s220, %s221
      %p233 = scmp.eq.s32.totalorder %s35, 1
      %p234 = por %p232, %p233
      %p236 = scmp.ne.s32.totalorder %s221, %s235
      %p237 = scmp.eq.s32.totalorder %s35, 0
      %p238 = por %p236, %p237
      %s240 = sadd.s32 %s239, 1
      %p243 = scmp.eq.s32.totalorder %s29, 1
      %p244 = scmp.ne.s32.totalorder %s239, %s241
      %p245 = scmp.eq.s32.totalorder %s29, 0
      %p246 = por %p244, %p245
      %p247 = scmp.ne.s32.totalorder %s239, %s241
      %p248 = scmp.eq.s32.totalorder %s34, 1
      %p249 = por %p247, %p248
      %p250 = scmp.ne.s32.totalorder %s241, %s242
      %p251 = scmp.eq.s32.totalorder %s34, 0
      %p252 = por %p250, %p251
      %p253 = scmp.ne.s32.totalorder %s241, %s242
      %p254 = scmp.eq.s32.totalorder %s35, 1
      %p255 = por %p253, %p254
      %p257 = scmp.ne.s32.totalorder %s242, %s256
      %p258 = scmp.eq.s32.totalorder %s35, 0
      %p259 = por %p257, %p258
      %s261 = sadd.s32 %s260, 1
      %p264 = scmp.eq.s32.totalorder %s29, 1
      %p265 = scmp.ne.s32.totalorder %s260, %s262
      %p266 = scmp.eq.s32.totalorder %s29, 0
      %p267 = por %p265, %p266
      %p268 = scmp.ne.s32.totalorder %s260, %s262
      %p269 = scmp.eq.s32.totalorder %s34, 1
      %p270 = por %p268, %p269
      %p271 = scmp.ne.s32.totalorder %s262, %s263
      %p272 = scmp.eq.s32.totalorder %s34, 0
      %p273 = por %p271, %p272
      %p274 = scmp.ne.s32.totalorder %s262, %s263
      %p275 = scmp.eq.s32.totalorder %s35, 1
      %p276 = por %p274, %p275
      %p278 = scmp.ne.s32.totalorder %s263, %s277
      %p279 = scmp.eq.s32.totalorder %s35, 0
      %p280 = por %p278, %p279
      %s281 = ssub.s32 %s36, %s48
      %p282 = scmp.eq.s32.totalorder %s281, 0
      %s284 = sadd.s32 %s283, 1
      %s285 = scalar_select %p282, %s283, %s284
      %p288 = pneg %p282
      %p289 = scmp.eq.s32.totalorder %s29, 1
      %p290 = por %p288, %p289
      %p291 = scmp.ne.s32.totalorder %s283, %s286
      %p292 = scmp.eq.s32.totalorder %s29, 0
      %p293 = por %p291, %p292
      %p294 = scmp.ne.s32.totalorder %s283, %s286
      %p295 = scmp.eq.s32.totalorder %s34, 1
      %p296 = por %p294, %p295
      %p297 = scmp.ne.s32.totalorder %s286, %s287
      %p298 = scmp.eq.s32.totalorder %s34, 0
      %p299 = por %p297, %p298
      %p300 = scmp.ne.s32.totalorder %s286, %s287
      %p301 = scmp.eq.s32.totalorder %s35, 1
      %p302 = por %p300, %p301
      %p304 = scmp.ne.s32.totalorder %s287, %s303
      %p305 = scmp.eq.s32.totalorder %s35, 0
      %p306 = por %p304, %p305
      %p307 = scmp.le.s32.totalorder 1, %s29
      %p308 = scmp.lt.s32.totalorder %s29, 3
      %p309 = pnand %p307, %p308
      %p310 = pneg %p309
      // Predicated region
      $region9: #{tpu_custom_call.1} parent=5 // pred_check
        _
      $region10: #{tpu_custom_call.1} parent=5 // pred_check_branch
        %312 = sbr.rel (%p309) target = $region12
      $region11: #{tpu_custom_call.1} parent=5 // pred_region
        %s313 = ssub.s32 %s29, 1
        // Predicated region
        $region13: #{tpu_custom_call.1} parent=11 // pred_check
          %p314 = pneg %p126
        $region14: #{tpu_custom_call.1} parent=11 // pred_check_branch
          %316 = sbr.rel (%p314) target = $region16
        $region15: #{tpu_custom_call.1} parent=11 // pred_region
          %s318 = ssub.s32 512, 512
          %319 = vsyncadd [#allocation8], %s318
          %s321 = sshll.u32 [#allocation9], 4
          %s322 = int_to_ptr.vmem [resolvable:$true] %s321
          %324 = dma.hbm_to_vmem [thread:$0]  %s2, 512, %s322, [#allocation8]
        $region16: #{tpu_custom_call.1} parent=11 // pred_fallthru
          _
        // Predicated region
        $region17: #{tpu_custom_call.1} parent=11 // pred_check
          %p325 = pneg %p147
        $region18: #{tpu_custom_call.1} parent=11 // pred_check_branch
          %327 = sbr.rel (%p325) target = $region20
        $region19: #{tpu_custom_call.1} parent=11 // pred_region
          %s329 = ssub.s32 512, 512
          %330 = vsyncadd [#allocation11], %s329
          %s332 = sshll.u32 [#allocation10], 4
          %s333 = int_to_ptr.vmem [resolvable:$true] %s332
          %335 = dma.hbm_to_vmem [thread:$0]  %s3, 512, %s333, [#allocation11]
        $region20: #{tpu_custom_call.1} parent=11 // pred_fallthru
          _
        // Predicated region
        $region21: #{tpu_custom_call.1} parent=11 // pred_check
          %p336 = pneg %p168
        $region22: #{tpu_custom_call.1} parent=11 // pred_check_branch
          %338 = sbr.rel (%p336) target = $region24
        $region23: #{tpu_custom_call.1} parent=11 // pred_region
          %s340 = ssub.s32 512, 512
          %341 = vsyncadd [#allocation11], %s340
          %s343 = sshll.u32 [#allocation12], 4
          %s344 = int_to_ptr.vmem [resolvable:$true] %s343
          %346 = dma.hbm_to_vmem [thread:$0]  %s4, 512, %s344, [#allocation11]
        $region24: #{tpu_custom_call.1} parent=11 // pred_fallthru
          _
        // Predicated region
        $region25: #{tpu_custom_call.1} parent=11 // pred_check
          %p347 = pneg %p189
        $region26: #{tpu_custom_call.1} parent=11 // pred_check_branch
          %349 = sbr.rel (%p347) target = $region28
        $region27: #{tpu_custom_call.1} parent=11 // pred_region
          %s351 = ssub.s32 512, 512
          %352 = vsyncadd [#allocation14], %s351
          %s354 = sshll.u32 [#allocation13], 4
          %s355 = int_to_ptr.vmem [resolvable:$true] %s354
          %357 = dma.hbm_to_vmem [thread:$0]  %s5, 512, %s355, [#allocation14]
        $region28: #{tpu_custom_call.1} parent=11 // pred_fallthru
          _
        // Predicated region
        $region29: #{tpu_custom_call.1} parent=11 // pred_check
          %p358 = pneg %p210
        $region30: #{tpu_custom_call.1} parent=11 // pred_check_branch
          %360 = sbr.rel (%p358) target = $region32
        $region31: #{tpu_custom_call.1} parent=11 // pred_region
          %s362 = ssub.s32 512, 512
          %363 = vsyncadd [#allocation14], %s362
          %s365 = sshll.u32 [#allocation15], 4
          %s366 = int_to_ptr.vmem [resolvable:$true] %s365
          %368 = dma.hbm_to_vmem [thread:$0]  %s6, 512, %s366, [#allocation14]
        $region32: #{tpu_custom_call.1} parent=11 // pred_fallthru
          _
        // Predicated region
        $region33: #{tpu_custom_call.1} parent=11 // pred_check
          %p369 = pneg %p231
        $region34: #{tpu_custom_call.1} parent=11 // pred_check_branch
          %371 = sbr.rel (%p369) target = $region36
        $region35: #{tpu_custom_call.1} parent=11 // pred_region
          %s373 = ssub.s32 512, 512
          %374 = vsyncadd [#allocation17], %s373
          %s376 = sshll.u32 [#allocation16], 4
          %s377 = int_to_ptr.vmem [resolvable:$true] %s376
          %379 = dma.hbm_to_vmem [thread:$0]  %s7, 512, %s377, [#allocation17]
        $region36: #{tpu_custom_call.1} parent=11 // pred_fallthru
          _
        // Predicated region
        $region37: #{tpu_custom_call.1} parent=11 // pred_check
          %p380 = pneg %p252
        $region38: #{tpu_custom_call.1} parent=11 // pred_check_branch
          %382 = sbr.rel (%p380) target = $region40
        $region39: #{tpu_custom_call.1} parent=11 // pred_region
          %s384 = ssub.s32 512, 512
          %385 = vsyncadd [#allocation17], %s384
          %s387 = sshll.u32 [#allocation18], 4
          %s388 = int_to_ptr.vmem [resolvable:$true] %s387
          %390 = dma.hbm_to_vmem [thread:$0]  %s8, 512, %s388, [#allocation17]
        $region40: #{tpu_custom_call.1} parent=11 // pred_fallthru
          _
        // Predicated region
        $region41: #{tpu_custom_call.1} parent=11 // pred_check
          %p391 = pneg %p273
        $region42: #{tpu_custom_call.1} parent=11 // pred_check_branch
          %393 = sbr.rel (%p391) target = $region44
        $region43: #{tpu_custom_call.1} parent=11 // pred_region
          %s395 = ssub.s32 512, 512
          %396 = vsyncadd [#allocation20], %s395
          %s398 = sshll.u32 [#allocation19], 4
          %s399 = int_to_ptr.vmem [resolvable:$true] %s398
          %401 = dma.hbm_to_vmem [thread:$0]  %s9, 512, %s399, [#allocation20]
        $region44: #{tpu_custom_call.1} parent=11 // pred_fallthru
          _
      $region12: #{tpu_custom_call.1} parent=5 // pred_fallthru
        _
      %p402 = scmp.lt.s32.totalorder %s29, 2
      // Predicated region
      $region45: #{tpu_custom_call.1} parent=5 // pred_check
        %p403 = pneg %p402
      $region46: #{tpu_custom_call.1} parent=5 // pred_check_branch
        %405 = sbr.rel (%p403) target = $region48
      $region47: #{tpu_custom_call.1} parent=5 // pred_region
        // Predicated region
        $region49: #{tpu_custom_call.1} parent=47 // pred_check
          %p406 = pneg %p67
        $region50: #{tpu_custom_call.1} parent=47 // pred_check_branch
          %408 = sbr.rel (%p406) target = $region52
        $region51: #{tpu_custom_call.1} parent=47 // pred_region
          %s409 = sand.u32 %s57, 1
          %s410 = scalar_lea.sflag [#allocation5], %s409
          %s411 = sand.u32 %s57, 1
          %s412 = smul.addr %s411, 128
          %s413 = scalar_lea.vmem [#allocation4], %s412
          %s414 = sadd.s32 %s36, %s37
          %p415 = scmp.lt.s32.totalorder %s414, 1
          %s416 = scalar_select %p415, %s414, 1
          %s417 = smul.u32 2, %s416
          %s418 = ssub.s32 3, %s417
          %p419 = scmp.lt.s32.totalorder %s418, 2
          %s420 = scalar_select %p419, %s418, 2
          %s421 = smul.u32 128, %s420
          %s422 = smul.u32 %s421, 8
          %s424 = ssub.s32 2048, %s422
          %425 = vsyncadd %s410, %s424
          %p426 = scmp.ne.s32.totalorder 0, %s422
          %s427 = smul.addr %s417, 8
          %s428 = smul.addr %s427, 128
          %s429 = scalar_lea.hbm %s0, %s428
          %s430 = smul.u32 64, %s420
          %s431 = sshll.u32 %s413, 4
          %s432 = int_to_ptr.vmem [resolvable:$true] %s431
          %s433 = sshll.u32 %s430, 4
          %437 = dma.hbm_to_vmem [thread:$0]  (%p426), %s429, %s433, %s432, %s410, 1024, 1024, 64
        $region52: #{tpu_custom_call.1} parent=47 // pred_fallthru
          _
        // Predicated region
        $region53: #{tpu_custom_call.1} parent=47 // pred_check
          %p438 = pneg %p99
        $region54: #{tpu_custom_call.1} parent=47 // pred_check_branch
          %440 = sbr.rel (%p438) target = $region56
        $region55: #{tpu_custom_call.1} parent=47 // pred_region
          %s441 = sand.u32 %s29, 1
          %s442 = scalar_lea.sflag [#allocation8], %s441
          %s443 = sand.u32 %s89, 1
          %s444 = smul.addr %s443, 128
          %s445 = scalar_lea.vmem [#allocation7], %s444
          %s446 = sadd.s32 %s36, %s37
          %p447 = scmp.lt.s32.totalorder %s446, 1
          %s448 = scalar_select %p447, %s446, 1
          %s449 = smul.u32 2, %s448
          %s450 = ssub.s32 3, %s449
          %p451 = scmp.lt.s32.totalorder %s450, 2
          %s452 = scalar_select %p451, %s450, 2
          %s453 = smul.u32 128, %s452
          %s454 = smul.u32 %s453, 8
          %s456 = ssub.s32 2048, %s454
          %457 = vsyncadd %s442, %s456
          %p458 = scmp.ne.s32.totalorder 0, %s454
          %s459 = smul.addr %s449, 8
          %s460 = smul.addr %s459, 128
          %s461 = scalar_lea.hbm %s1, %s460
          %s462 = smul.u32 64, %s452
          %s463 = sshll.u32 %s445, 4
          %s464 = int_to_ptr.vmem [resolvable:$true] %s463
          %s465 = sshll.u32 %s462, 4
          %469 = dma.hbm_to_vmem [thread:$0]  (%p458), %s461, %s465, %s464, %s442, 1024, 1024, 64
        $region56: #{tpu_custom_call.1} parent=47 // pred_fallthru
          _
      $region48: #{tpu_custom_call.1} parent=5 // pred_fallthru
        _
      %p470 = scmp.le.s32.totalorder 1, %s29
      %p471 = scmp.lt.s32.totalorder %s29, 3
      %p472 = pnand %p470, %p471
      %p473 = pneg %p472
      // Predicated region
      $region57: #{tpu_custom_call.1} parent=5 // pred_check
        _
      $region58: #{tpu_custom_call.1} parent=5 // pred_check_branch
        %475 = sbr.rel (%p472) target = $region60
      $region59: #{tpu_custom_call.1} parent=5 // pred_region
        %s476 = ssub.s32 %s29, 1
        %s477 = sand.u32 %s60, 1
        %s478 = scalar_lea.sflag [#allocation5], %s477
        %s479 = sand.u32 %s60, 1
        %s480 = smul.addr %s479, 128
        %s481 = scalar_lea.vmem [#allocation4], %s480
        // Predicated region
        $region61: #{tpu_custom_call.1} parent=59 // pred_check
          %p482 = pneg %p73
        $region62: #{tpu_custom_call.1} parent=59 // pred_check_branch
          %484 = sbr.rel (%p482) target = $region64
        $region63: #{tpu_custom_call.1} parent=59 // pred_region
          %485 = dma.done %s478, 2048
        $region64: #{tpu_custom_call.1} parent=59 // pred_fallthru
          _
        %s486 = sand.u32 %s34, 1
        %s487 = scalar_lea.sflag [#allocation8], %s486
        %s488 = sand.u32 %s92, 1
        %s489 = smul.addr %s488, 128
        %s490 = scalar_lea.vmem [#allocation7], %s489
        // Predicated region
        $region65: #{tpu_custom_call.1} parent=59 // pred_check
          %p491 = pneg %p105
        $region66: #{tpu_custom_call.1} parent=59 // pred_check_branch
          %493 = sbr.rel (%p491) target = $region68
        $region67: #{tpu_custom_call.1} parent=59 // pred_region
          %494 = dma.done %s487, 2048
        $region68: #{tpu_custom_call.1} parent=59 // pred_fallthru
          _
        // Predicated region
        $region69: #{tpu_custom_call.1} parent=59 // pred_check
          %p495 = pneg %p126
        $region70: #{tpu_custom_call.1} parent=59 // pred_check_branch
          %497 = sbr.rel (%p495) target = $region72
        $region71: #{tpu_custom_call.1} parent=59 // pred_region
          %498 = dma.done [#allocation8], 512
        $region72: #{tpu_custom_call.1} parent=59 // pred_fallthru
          _
        // Predicated region
        $region73: #{tpu_custom_call.1} parent=59 // pred_check
          %p499 = pneg %p147
        $region74: #{tpu_custom_call.1} parent=59 // pred_check_branch
          %501 = sbr.rel (%p499) target = $region76
        $region75: #{tpu_custom_call.1} parent=59 // pred_region
          %502 = dma.done [#allocation11], 512
        $region76: #{tpu_custom_call.1} parent=59 // pred_fallthru
          _
        // Predicated region
        $region77: #{tpu_custom_call.1} parent=59 // pred_check
          %p503 = pneg %p168
        $region78: #{tpu_custom_call.1} parent=59 // pred_check_branch
          %505 = sbr.rel (%p503) target = $region80
        $region79: #{tpu_custom_call.1} parent=59 // pred_region
          %506 = dma.done [#allocation11], 512
        $region80: #{tpu_custom_call.1} parent=59 // pred_fallthru
          _
        // Predicated region
        $region81: #{tpu_custom_call.1} parent=59 // pred_check
          %p507 = pneg %p189
        $region82: #{tpu_custom_call.1} parent=59 // pred_check_branch
          %509 = sbr.rel (%p507) target = $region84
        $region83: #{tpu_custom_call.1} parent=59 // pred_region
          %510 = dma.done [#allocation14], 512
        $region84: #{tpu_custom_call.1} parent=59 // pred_fallthru
          _
        // Predicated region
        $region85: #{tpu_custom_call.1} parent=59 // pred_check
          %p511 = pneg %p210
        $region86: #{tpu_custom_call.1} parent=59 // pred_check_branch
          %513 = sbr.rel (%p511) target = $region88
        $region87: #{tpu_custom_call.1} parent=59 // pred_region
          %514 = dma.done [#allocation14], 512
        $region88: #{tpu_custom_call.1} parent=59 // pred_fallthru
          _
        // Predicated region
        $region89: #{tpu_custom_call.1} parent=59 // pred_check
          %p515 = pneg %p231
        $region90: #{tpu_custom_call.1} parent=59 // pred_check_branch
          %517 = sbr.rel (%p515) target = $region92
        $region91: #{tpu_custom_call.1} parent=59 // pred_region
          %518 = dma.done [#allocation17], 512
        $region92: #{tpu_custom_call.1} parent=59 // pred_fallthru
          _
        // Predicated region
        $region93: #{tpu_custom_call.1} parent=59 // pred_check
          %p519 = pneg %p252
        $region94: #{tpu_custom_call.1} parent=59 // pred_check_branch
          %521 = sbr.rel (%p519) target = $region96
        $region95: #{tpu_custom_call.1} parent=59 // pred_region
          %522 = dma.done [#allocation17], 512
        $region96: #{tpu_custom_call.1} parent=59 // pred_fallthru
          _
        // Predicated region
        $region97: #{tpu_custom_call.1} parent=59 // pred_check
          %p523 = pneg %p273
        $region98: #{tpu_custom_call.1} parent=59 // pred_check_branch
          %525 = sbr.rel (%p523) target = $region100
        $region99: #{tpu_custom_call.1} parent=59 // pred_region
          %526 = dma.done [#allocation20], 512
        $region100: #{tpu_custom_call.1} parent=59 // pred_fallthru
          _
        %s527 = sand.u32 %s60, 1
        %s528 = scalar_lea.sflag [#allocation5], %s527
        %s529 = sand.u32 %s60, 1
        %s530 = smul.addr %s529, 128
        %s531 = scalar_lea.vmem [#allocation4], %s530
        %p532 = pneg %p73
        %p533 = pneg %p70
        %s534 = sand.u32 %s34, 1
        %s535 = scalar_lea.sflag [#allocation8], %s534
        %s536 = sand.u32 %s92, 1
        %s537 = smul.addr %s536, 128
        %s538 = scalar_lea.vmem [#allocation7], %s537
        %p539 = pneg %p105
        %p540 = pneg %p102
        %p541 = pneg %p126
        %p542 = pneg %p123
        %p543 = pneg %p147
        %p544 = pneg %p144
        %p545 = pneg %p168
        %p546 = pneg %p165
        %p547 = pneg %p189
        %p548 = pneg %p186
        %p549 = pneg %p210
        %p550 = pneg %p207
        %p551 = pneg %p231
        %p552 = pneg %p228
        %p553 = pneg %p252
        %p554 = pneg %p249
        %p555 = pneg %p273
        %p556 = pneg %p270
        %p557 = pneg %p299
        %p558 = pneg %p296
        %s559 = sand.u32 %s286, 1
        %s560 = scalar_lea.sflag [#allocation6], %s559
        %s561 = sand.u32 %s286, 1
        %s562 = smul.addr %s561, 8
        %s563 = scalar_lea.vmem [#allocation21], %s562
        %s564 = sadd.s32 %s38, %s39
        %p565 = scmp.lt.s32.totalorder %s564, 1
        %s566 = scalar_select %p565, %s564, 1
        %s567 = smul.u32 2, %s566
        %s568 = ssub.s32 3, %s567
        %p569 = scmp.lt.s32.totalorder %s568, 2
        %s570 = scalar_select %p569, %s568, 2
        %s571 = smul.u32 128, %s570
        %s572 = smul.u32 %s571, 8
        %s573 = sadd.s32 %s38, %s39
        %p574 = scmp.lt.s32.totalorder %s573, 1
        %s575 = scalar_select %p574, %s573, 1
        %s576 = smul.u32 2, %s575
        %s577 = ssub.s32 3, %s576
        %p578 = scmp.lt.s32.totalorder %s577, 2
        %s579 = scalar_select %p578, %s577, 2
        %s580 = smul.u32 128, %s579
        %s581 = smul.u32 %s580, 8
        %p582 = scmp.eq.s32.totalorder %s39, 0
        // Predicated region
        $region101: #{tpu_custom_call.1} parent=59 // pred_check
          %p583 = pneg %p582
        $region102: #{tpu_custom_call.1} parent=59 // pred_check_branch
          %585 = sbr.rel (%p583) target = $region104
        $region103: #{tpu_custom_call.1} parent=59 // pred_region
          %586 = vst [vmem:[#allocation2] sm:$0xff] 0.0
          %587 = vst [vmem:[#allocation2 + $0x8] sm:$0xff] 0.0
          %588 = vst [vmem:[#allocation2 + $0x10] sm:$0xff] 0.0
          %589 = vst [vmem:[#allocation2 + $0x18] sm:$0xff] 0.0
          %590 = vst [vmem:[#allocation2 + $0x20] sm:$0xff] 0.0
          %591 = vst [vmem:[#allocation2 + $0x28] sm:$0xff] 0.0
          %592 = vst [vmem:[#allocation2 + $0x30] sm:$0xff] 0.0
          %593 = vst [vmem:[#allocation2 + $0x38] sm:$0xff] 0.0
          %594 = vst [vmem:[#allocation2 + $0x40] sm:$0xff] 0.0
          %595 = vst [vmem:[#allocation2 + $0x48] sm:$0xff] 0.0
          %596 = vst [vmem:[#allocation2 + $0x50] sm:$0xff] 0.0
          %597 = vst [vmem:[#allocation2 + $0x58] sm:$0xff] 0.0
          %598 = vst [vmem:[#allocation2 + $0x60] sm:$0xff] 0.0
          %599 = vst [vmem:[#allocation2 + $0x68] sm:$0xff] 0.0
          %600 = vst [vmem:[#allocation2 + $0x70] sm:$0xff] 0.0
          %601 = vst [vmem:[#allocation2 + $0x78] sm:$0xff] 0.0
          %s602 = scalar_lea.smem [#allocation3], 0
          %603 = sst [smem:[%s602]] 0.0
          %s604 = scalar_lea.smem [#allocation3], 1
          %605 = sst [smem:[%s604]] 0.0
          %s606 = scalar_lea.smem [#allocation3], 2
          %607 = sst [smem:[%s606]] 0.0
          %s608 = scalar_lea.smem [#allocation3], 3
          %609 = sst [smem:[%s608]] 0.0
        $region104: #{tpu_custom_call.1} parent=59 // pred_fallthru
          _
        %p610 = scmp.eq.s32.totalorder %s38, 0
        %p611 = pnand %p582, %p610
        %p612 = pneg %p611
        // Predicated region
        $region105: #{tpu_custom_call.1} parent=59 // pred_check
          _
        $region106: #{tpu_custom_call.1} parent=59 // pred_check_branch
          %614 = sbr.rel (%p611) target = $region108
        $region107: #{tpu_custom_call.1} parent=59 // pred_region
          %v615 = vld [vmem:[#allocation9] sm:$0xff]
          %v616 = vld [vmem:[#allocation9 + $0x8] sm:$0xff]
          %v617 = vld [vmem:[#allocation9 + $0x10] sm:$0xff]
          %v618 = vld [vmem:[#allocation9 + $0x18] sm:$0xff]
          %v619 = vld [vmem:[#allocation10] sm:$0xff]
          %v620 = vld [vmem:[#allocation10 + $0x8] sm:$0xff]
          %v621 = vld [vmem:[#allocation10 + $0x10] sm:$0xff]
          %v622 = vld [vmem:[#allocation10 + $0x18] sm:$0xff]
          %v623 = vld [vmem:[#allocation12] sm:$0xff]
          %v624 = vld [vmem:[#allocation12 + $0x8] sm:$0xff]
          %v625 = vld [vmem:[#allocation12 + $0x10] sm:$0xff]
          %v626 = vld [vmem:[#allocation12 + $0x18] sm:$0xff]
          %v627 = vmul.f32 %v619, 1.4142135
          %v628 = vmul.f32 %v620, 1.4142135
          %v629 = vmul.f32 %v621, 1.4142135
          %v630 = vmul.f32 %v622, 1.4142135
          %v631 = vrcp.pop %v627
          %v632 = vmul.f32 1.0, %v631
          %v633 = vrcp.pop %v628
          %v634 = vmul.f32 1.0, %v633
          %v635 = vrcp.pop %v629
          %v636 = vmul.f32 1.0, %v635
          %v637 = vrcp.pop %v630
          %v638 = vmul.f32 1.0, %v637
          %v639 = vadd.f32 %v623, 0.5
          %v640 = vadd.f32 %v624, 0.5
          %v641 = vadd.f32 %v625, 0.5
          %v642 = vadd.f32 %v626, 0.5
          %v643 = vsub.f32 %v639, %v615
          %v644 = vsub.f32 %v640, %v616
          %v645 = vsub.f32 %v641, %v617
          %v646 = vsub.f32 %v642, %v618
          %v647 = vmul.f32 %v643, %v632
          %v648 = vmul.f32 %v644, %v634
          %v649 = vmul.f32 %v645, %v636
          %v650 = vmul.f32 %v646, %v638
          %v651 = verf.f32.pop %v647
          %v652 = verf.f32.pop %v648
          %v653 = verf.f32.pop %v649
          %v654 = verf.f32.pop %v650
          %v655 = vsub.f32 %v623, 0.5
          %v656 = vsub.f32 %v624, 0.5
          %v657 = vsub.f32 %v625, 0.5
          %v658 = vsub.f32 %v626, 0.5
          %v659 = vsub.f32 %v655, %v615
          %v660 = vsub.f32 %v656, %v616
          %v661 = vsub.f32 %v657, %v617
          %v662 = vsub.f32 %v658, %v618
          %v663 = vmul.f32 %v659, %v632
          %v664 = vmul.f32 %v660, %v634
          %v665 = vmul.f32 %v661, %v636
          %v666 = vmul.f32 %v662, %v638
          %v667 = verf.f32.pop %v663
          %v668 = verf.f32.pop %v664
          %v669 = verf.f32.pop %v665
          %v670 = verf.f32.pop %v666
          %v671 = vsub.f32 %v651, %v667
          %v672 = vsub.f32 %v652, %v668
          %v673 = vsub.f32 %v653, %v669
          %v674 = vsub.f32 %v654, %v670
          %v675 = vmul.f32 %v671, 0.5
          %v676 = vmul.f32 %v672, 0.5
          %v677 = vmul.f32 %v673, 0.5
          %v678 = vmul.f32 %v674, 0.5
          %v679 = vand.u32 2147483647, %v675
          %v680 = vand.u32 2147483647, %v676
          %v681 = vand.u32 2147483647, %v677
          %v682 = vand.u32 2147483647, %v678
          %v683 = vadd.f32 %v679, 1e-06
          %v684 = vadd.f32 %v680, 1e-06
          %v685 = vadd.f32 %v681, 1e-06
          %v686 = vadd.f32 %v682, 1e-06
          %v687 = vlog2.pop %v683
          %v688 = vmul.f32 %v687, 0.6931472
          %v689 = vlog2.pop %v684
          %v690 = vmul.f32 %v689, 0.6931472
          %v691 = vlog2.pop %v685
          %v692 = vmul.f32 %v691, 0.6931472
          %v693 = vlog2.pop %v686
          %v694 = vmul.f32 %v693, 0.6931472
          %v695 = vrcp.pop 0.6931472
          %v696 = vmul.f32 %v688, %v695
          %v697 = vmul.f32 %v690, %v695
          %v698 = vmul.f32 %v692, %v695
          %v699 = vmul.f32 %v694, %v695
          %v700 = vsub.f32 0.0, %v696
          %v701 = vsub.f32 0.0, %v697
          %v702 = vsub.f32 0.0, %v698
          %v703 = vsub.f32 0.0, %v699
          %v704 = vadd.f32 %v700, %v701
          %v705 = vadd.f32 %v704, %v702
          %v706 = vadd.f32 %v705, %v703
          %707 = vadd.xlane.f32.xlu0 %v706
          %v708 = vpop.xlane.xlu0 %707
          %v709 = vrot.slane %v708, 4
          %v710 = vadd.f32 %v708, %v709
          %v711 = vrot.slane %v710, 2
          %v712 = vadd.f32 %v710, %v711
          %v713 = vrot.slane %v712, 1
          %v714 = vadd.f32 %v712, %v713
          %s715 = vtos %v714
          %s716 = smul.f32 %s715, 0.5
          %s717 = scalar_lea.smem [#allocation3], 0
          %718 = sst [smem:[%s717]] %s716
          %v719 = vld [vmem:[#allocation13] sm:$0xff]
          %v720 = vld [vmem:[#allocation13 + $0x8] sm:$0xff]
          %v721 = vld [vmem:[#allocation13 + $0x10] sm:$0xff]
          %v722 = vld [vmem:[#allocation13 + $0x18] sm:$0xff]
          %v723 = vadd.f32 %v719, 0.5
          %v724 = vadd.f32 %v720, 0.5
          %v725 = vadd.f32 %v721, 0.5
          %v726 = vadd.f32 %v722, 0.5
          %v727 = vxor.u32 %v723, 2147483648
          %v728 = vxor.u32 %v724, 2147483648
          %v729 = vxor.u32 %v725, 2147483648
          %v730 = vxor.u32 %v726, 2147483648
          %v731 = vmul.f32 %v727, 1.442695
          %v732 = vpow.pop %v731
          %v733 = vmul.f32 %v728, 1.442695
          %v734 = vpow.pop %v733
          %v735 = vmul.f32 %v729, 1.442695
          %v736 = vpow.pop %v735
          %v737 = vmul.f32 %v730, 1.442695
          %v738 = vpow.pop %v737
          %v739 = vadd.f32 %v732, 1.0
          %v740 = vadd.f32 %v734, 1.0
          %v741 = vadd.f32 %v736, 1.0
          %v742 = vadd.f32 %v738, 1.0
          %v743 = vrcp.pop %v739
          %v744 = vmul.f32 1.0, %v743
          %v745 = vrcp.pop %v740
          %v746 = vmul.f32 1.0, %v745
          %v747 = vrcp.pop %v741
          %v748 = vmul.f32 1.0, %v747
          %v749 = vrcp.pop %v742
          %v750 = vmul.f32 1.0, %v749
          %v751 = vsub.f32 %v719, 0.5
          %v752 = vsub.f32 %v720, 0.5
          %v753 = vsub.f32 %v721, 0.5
          %v754 = vsub.f32 %v722, 0.5
          %v755 = vxor.u32 %v751, 2147483648
          %v756 = vxor.u32 %v752, 2147483648
          %v757 = vxor.u32 %v753, 2147483648
          %v758 = vxor.u32 %v754, 2147483648
          %v759 = vmul.f32 %v755, 1.442695
          %v760 = vpow.pop %v759
          %v761 = vmul.f32 %v756, 1.442695
          %v762 = vpow.pop %v761
          %v763 = vmul.f32 %v757, 1.442695
          %v764 = vpow.pop %v763
          %v765 = vmul.f32 %v758, 1.442695
          %v766 = vpow.pop %v765
          %v767 = vadd.f32 %v760, 1.0
          %v768 = vadd.f32 %v762, 1.0
          %v769 = vadd.f32 %v764, 1.0
          %v770 = vadd.f32 %v766, 1.0
          %v771 = vrcp.pop %v767
          %v772 = vmul.f32 1.0, %v771
          %v773 = vrcp.pop %v768
          %v774 = vmul.f32 1.0, %v773
          %v775 = vrcp.pop %v769
          %v776 = vmul.f32 1.0, %v775
          %v777 = vrcp.pop %v770
          %v778 = vmul.f32 1.0, %v777
          %v779 = vsub.f32 %v744, %v772
          %v780 = vsub.f32 %v746, %v774
          %v781 = vsub.f32 %v748, %v776
          %v782 = vsub.f32 %v750, %v778
          %v783 = vand.u32 2147483647, %v779
          %v784 = vand.u32 2147483647, %v780
          %v785 = vand.u32 2147483647, %v781
          %v786 = vand.u32 2147483647, %v782
          %v787 = vadd.f32 %v783, 1e-06
          %v788 = vadd.f32 %v784, 1e-06
          %v789 = vadd.f32 %v785, 1e-06
          %v790 = vadd.f32 %v786, 1e-06
          %v791 = vlog2.pop %v787
          %v792 = vmul.f32 %v791, 0.6931472
          %v793 = vlog2.pop %v788
          %v794 = vmul.f32 %v793, 0.6931472
          %v795 = vlog2.pop %v789
          %v796 = vmul.f32 %v795, 0.6931472
          %v797 = vlog2.pop %v790
          %v798 = vmul.f32 %v797, 0.6931472
          %v799 = vmul.f32 %v792, %v695
          %v800 = vmul.f32 %v794, %v695
          %v801 = vmul.f32 %v796, %v695
          %v802 = vmul.f32 %v798, %v695
          %v803 = vsub.f32 0.0, %v799
          %v804 = vsub.f32 0.0, %v800
          %v805 = vsub.f32 0.0, %v801
          %v806 = vsub.f32 0.0, %v802
          %v807 = vlaneseq
          %v808 = vshrl.u32 %v807, 7
          %vm809 = vcmp.lt.s32.totalorder %v808, 1
          %v810 = vsel %vm809, %v803, 0.0
          %v811 = vsel %vm809, %v804, 0.0
          %v812 = vsel %vm809, %v805, 0.0
          %v813 = vsel %vm809, %v806, 0.0
          %v814 = vadd.f32 %v810, %v811
          %v815 = vadd.f32 %v814, %v812
          %v816 = vadd.f32 %v815, %v813
          %817 = vadd.xlane.f32.xlu0 %v816
          %v818 = vpop.xlane.xlu0 %817
          %v819 = vrot.slane %v818, 4
          %v820 = vadd.f32 %v818, %v819
          %v821 = vrot.slane %v820, 2
          %v822 = vadd.f32 %v820, %v821
          %v823 = vrot.slane %v822, 1
          %v824 = vadd.f32 %v822, %v823
          %s825 = vtos %v824
          %s826 = smul.f32 %s825, 0.5
          %s827 = scalar_lea.smem [#allocation3], 1
          %828 = sst [smem:[%s827]] %s826
        $region108: #{tpu_custom_call.1} parent=59 // pred_fallthru
          _
        %p829 = scmp.eq.s32.totalorder %s38, 1
        %p830 = pnand %p582, %p829
        %p831 = pneg %p830
        // Predicated region
        $region109: #{tpu_custom_call.1} parent=59 // pred_check
          _
        $region110: #{tpu_custom_call.1} parent=59 // pred_check_branch
          %833 = sbr.rel (%p830) target = $region112
        $region111: #{tpu_custom_call.1} parent=59 // pred_region
          %v834 = vld [vmem:[#allocation15] sm:$0xff]
          %v835 = vld [vmem:[#allocation15 + $0x8] sm:$0xff]
          %v836 = vld [vmem:[#allocation15 + $0x10] sm:$0xff]
          %v837 = vld [vmem:[#allocation15 + $0x18] sm:$0xff]
          %v838 = vld [vmem:[#allocation16] sm:$0xff]
          %v839 = vld [vmem:[#allocation16 + $0x8] sm:$0xff]
          %v840 = vld [vmem:[#allocation16 + $0x10] sm:$0xff]
          %v841 = vld [vmem:[#allocation16 + $0x18] sm:$0xff]
          %v842 = vld [vmem:[#allocation18] sm:$0xff]
          %v843 = vld [vmem:[#allocation18 + $0x8] sm:$0xff]
          %v844 = vld [vmem:[#allocation18 + $0x10] sm:$0xff]
          %v845 = vld [vmem:[#allocation18 + $0x18] sm:$0xff]
          %v846 = vmul.f32 %v838, 1.4142135
          %v847 = vmul.f32 %v839, 1.4142135
          %v848 = vmul.f32 %v840, 1.4142135
          %v849 = vmul.f32 %v841, 1.4142135
          %v850 = vrcp.pop %v846
          %v851 = vmul.f32 1.0, %v850
          %v852 = vrcp.pop %v847
          %v853 = vmul.f32 1.0, %v852
          %v854 = vrcp.pop %v848
          %v855 = vmul.f32 1.0, %v854
          %v856 = vrcp.pop %v849
          %v857 = vmul.f32 1.0, %v856
          %v858 = vadd.f32 %v842, 0.5
          %v859 = vadd.f32 %v843, 0.5
          %v860 = vadd.f32 %v844, 0.5
          %v861 = vadd.f32 %v845, 0.5
          %v862 = vsub.f32 %v858, %v834
          %v863 = vsub.f32 %v859, %v835
          %v864 = vsub.f32 %v860, %v836
          %v865 = vsub.f32 %v861, %v837
          %v866 = vmul.f32 %v862, %v851
          %v867 = vmul.f32 %v863, %v853
          %v868 = vmul.f32 %v864, %v855
          %v869 = vmul.f32 %v865, %v857
          %v870 = verf.f32.pop %v866
          %v871 = verf.f32.pop %v867
          %v872 = verf.f32.pop %v868
          %v873 = verf.f32.pop %v869
          %v874 = vsub.f32 %v842, 0.5
          %v875 = vsub.f32 %v843, 0.5
          %v876 = vsub.f32 %v844, 0.5
          %v877 = vsub.f32 %v845, 0.5
          %v878 = vsub.f32 %v874, %v834
          %v879 = vsub.f32 %v875, %v835
          %v880 = vsub.f32 %v876, %v836
          %v881 = vsub.f32 %v877, %v837
          %v882 = vmul.f32 %v878, %v851
          %v883 = vmul.f32 %v879, %v853
          %v884 = vmul.f32 %v880, %v855
          %v885 = vmul.f32 %v881, %v857
          %v886 = verf.f32.pop %v882
          %v887 = verf.f32.pop %v883
          %v888 = verf.f32.pop %v884
          %v889 = verf.f32.pop %v885
          %v890 = vsub.f32 %v870, %v886
          %v891 = vsub.f32 %v871, %v887
          %v892 = vsub.f32 %v872, %v888
          %v893 = vsub.f32 %v873, %v889
          %v894 = vmul.f32 %v890, 0.5
          %v895 = vmul.f32 %v891, 0.5
          %v896 = vmul.f32 %v892, 0.5
          %v897 = vmul.f32 %v893, 0.5
          %v898 = vand.u32 2147483647, %v894
          %v899 = vand.u32 2147483647, %v895
          %v900 = vand.u32 2147483647, %v896
          %v901 = vand.u32 2147483647, %v897
          %v902 = vadd.f32 %v898, 1e-06
          %v903 = vadd.f32 %v899, 1e-06
          %v904 = vadd.f32 %v900, 1e-06
          %v905 = vadd.f32 %v901, 1e-06
          %v906 = vlog2.pop %v902
          %v907 = vmul.f32 %v906, 0.6931472
          %v908 = vlog2.pop %v903
          %v909 = vmul.f32 %v908, 0.6931472
          %v910 = vlog2.pop %v904
          %v911 = vmul.f32 %v910, 0.6931472
          %v912 = vlog2.pop %v905
          %v913 = vmul.f32 %v912, 0.6931472
          %v914 = vrcp.pop 0.6931472
          %v915 = vmul.f32 %v907, %v914
          %v916 = vmul.f32 %v909, %v914
          %v917 = vmul.f32 %v911, %v914
          %v918 = vmul.f32 %v913, %v914
          %v919 = vsub.f32 0.0, %v915
          %v920 = vsub.f32 0.0, %v916
          %v921 = vsub.f32 0.0, %v917
          %v922 = vsub.f32 0.0, %v918
          %v923 = vadd.f32 %v919, %v920
          %v924 = vadd.f32 %v923, %v921
          %v925 = vadd.f32 %v924, %v922
          %926 = vadd.xlane.f32.xlu0 %v925
          %v927 = vpop.xlane.xlu0 %926
          %v928 = vrot.slane %v927, 4
          %v929 = vadd.f32 %v927, %v928
          %v930 = vrot.slane %v929, 2
          %v931 = vadd.f32 %v929, %v930
          %v932 = vrot.slane %v931, 1
          %v933 = vadd.f32 %v931, %v932
          %s934 = vtos %v933
          %s935 = smul.f32 %s934, 0.5
          %s936 = scalar_lea.smem [#allocation3], 2
          %937 = sst [smem:[%s936]] %s935
          %v938 = vld [vmem:[#allocation19] sm:$0xff]
          %v939 = vld [vmem:[#allocation19 + $0x8] sm:$0xff]
          %v940 = vld [vmem:[#allocation19 + $0x10] sm:$0xff]
          %v941 = vld [vmem:[#allocation19 + $0x18] sm:$0xff]
          %v942 = vadd.f32 %v938, 0.5
          %v943 = vadd.f32 %v939, 0.5
          %v944 = vadd.f32 %v940, 0.5
          %v945 = vadd.f32 %v941, 0.5
          %v946 = vxor.u32 %v942, 2147483648
          %v947 = vxor.u32 %v943, 2147483648
          %v948 = vxor.u32 %v944, 2147483648
          %v949 = vxor.u32 %v945, 2147483648
          %v950 = vmul.f32 %v946, 1.442695
          %v951 = vpow.pop %v950
          %v952 = vmul.f32 %v947, 1.442695
          %v953 = vpow.pop %v952
          %v954 = vmul.f32 %v948, 1.442695
          %v955 = vpow.pop %v954
          %v956 = vmul.f32 %v949, 1.442695
          %v957 = vpow.pop %v956
          %v958 = vadd.f32 %v951, 1.0
          %v959 = vadd.f32 %v953, 1.0
          %v960 = vadd.f32 %v955, 1.0
          %v961 = vadd.f32 %v957, 1.0
          %v962 = vrcp.pop %v958
          %v963 = vmul.f32 1.0, %v962
          %v964 = vrcp.pop %v959
          %v965 = vmul.f32 1.0, %v964
          %v966 = vrcp.pop %v960
          %v967 = vmul.f32 1.0, %v966
          %v968 = vrcp.pop %v961
          %v969 = vmul.f32 1.0, %v968
          %v970 = vsub.f32 %v938, 0.5
          %v971 = vsub.f32 %v939, 0.5
          %v972 = vsub.f32 %v940, 0.5
          %v973 = vsub.f32 %v941, 0.5
          %v974 = vxor.u32 %v970, 2147483648
          %v975 = vxor.u32 %v971, 2147483648
          %v976 = vxor.u32 %v972, 2147483648
          %v977 = vxor.u32 %v973, 2147483648
          %v978 = vmul.f32 %v974, 1.442695
          %v979 = vpow.pop %v978
          %v980 = vmul.f32 %v975, 1.442695
          %v981 = vpow.pop %v980
          %v982 = vmul.f32 %v976, 1.442695
          %v983 = vpow.pop %v982
          %v984 = vmul.f32 %v977, 1.442695
          %v985 = vpow.pop %v984
          %v986 = vadd.f32 %v979, 1.0
          %v987 = vadd.f32 %v981, 1.0
          %v988 = vadd.f32 %v983, 1.0
          %v989 = vadd.f32 %v985, 1.0
          %v990 = vrcp.pop %v986
          %v991 = vmul.f32 1.0, %v990
          %v992 = vrcp.pop %v987
          %v993 = vmul.f32 1.0, %v992
          %v994 = vrcp.pop %v988
          %v995 = vmul.f32 1.0, %v994
          %v996 = vrcp.pop %v989
          %v997 = vmul.f32 1.0, %v996
          %v998 = vsub.f32 %v963, %v991
          %v999 = vsub.f32 %v965, %v993
          %v1000 = vsub.f32 %v967, %v995
          %v1001 = vsub.f32 %v969, %v997
          %v1002 = vand.u32 2147483647, %v998
          %v1003 = vand.u32 2147483647, %v999
          %v1004 = vand.u32 2147483647, %v1000
          %v1005 = vand.u32 2147483647, %v1001
          %v1006 = vadd.f32 %v1002, 1e-06
          %v1007 = vadd.f32 %v1003, 1e-06
          %v1008 = vadd.f32 %v1004, 1e-06
          %v1009 = vadd.f32 %v1005, 1e-06
          %v1010 = vlog2.pop %v1006
          %v1011 = vmul.f32 %v1010, 0.6931472
          %v1012 = vlog2.pop %v1007
          %v1013 = vmul.f32 %v1012, 0.6931472
          %v1014 = vlog2.pop %v1008
          %v1015 = vmul.f32 %v1014, 0.6931472
          %v1016 = vlog2.pop %v1009
          %v1017 = vmul.f32 %v1016, 0.6931472
          %v1018 = vmul.f32 %v1011, %v914
          %v1019 = vmul.f32 %v1013, %v914
          %v1020 = vmul.f32 %v1015, %v914
          %v1021 = vmul.f32 %v1017, %v914
          %v1022 = vsub.f32 0.0, %v1018
          %v1023 = vsub.f32 0.0, %v1019
          %v1024 = vsub.f32 0.0, %v1020
          %v1025 = vsub.f32 0.0, %v1021
          %v1026 = vlaneseq
          %v1027 = vshrl.u32 %v1026, 7
          %vm1028 = vcmp.lt.s32.totalorder %v1027, 1
          %v1029 = vsel %vm1028, %v1022, 0.0
          %v1030 = vsel %vm1028, %v1023, 0.0
          %v1031 = vsel %vm1028, %v1024, 0.0
          %v1032 = vsel %vm1028, %v1025, 0.0
          %v1033 = vadd.f32 %v1029, %v1030
          %v1034 = vadd.f32 %v1033, %v1031
          %v1035 = vadd.f32 %v1034, %v1032
          %1036 = vadd.xlane.f32.xlu0 %v1035
          %v1037 = vpop.xlane.xlu0 %1036
          %v1038 = vrot.slane %v1037, 4
          %v1039 = vadd.f32 %v1037, %v1038
          %v1040 = vrot.slane %v1039, 2
          %v1041 = vadd.f32 %v1039, %v1040
          %v1042 = vrot.slane %v1041, 1
          %v1043 = vadd.f32 %v1041, %v1042
          %s1044 = vtos %v1043
          %s1045 = smul.f32 %s1044, 0.5
          %s1046 = scalar_lea.smem [#allocation3], 3
          %1047 = sst [smem:[%s1046]] %s1045
        $region112: #{tpu_custom_call.1} parent=59 // pred_fallthru
          _
        %v1048 = vld [vmem:[%s481] sm:$0xff]
        %v1049 = vld [vmem:[%s481 + $0x8] sm:$0xff]
        %v1050 = vld [vmem:[%s481 + $0x10] sm:$0xff]
        %v1051 = vld [vmem:[%s481 + $0x18] sm:$0xff]
        %v1052 = vld [vmem:[%s481 + $0x20] sm:$0xff]
        %v1053 = vld [vmem:[%s481 + $0x28] sm:$0xff]
        %v1054 = vld [vmem:[%s481 + $0x30] sm:$0xff]
        %v1055 = vld [vmem:[%s481 + $0x38] sm:$0xff]
        %v1056 = vld [vmem:[%s481 + $0x40] sm:$0xff]
        %v1057 = vld [vmem:[%s481 + $0x48] sm:$0xff]
        %v1058 = vld [vmem:[%s481 + $0x50] sm:$0xff]
        %v1059 = vld [vmem:[%s481 + $0x58] sm:$0xff]
        %v1060 = vld [vmem:[%s481 + $0x60] sm:$0xff]
        %v1061 = vld [vmem:[%s481 + $0x68] sm:$0xff]
        %v1062 = vld [vmem:[%s481 + $0x70] sm:$0xff]
        %v1063 = vld [vmem:[%s481 + $0x78] sm:$0xff]
        %v1064 = vld [vmem:[%s490] sm:$0xff]
        %v1065 = vld [vmem:[%s490 + $0x8] sm:$0xff]
        %v1066 = vld [vmem:[%s490 + $0x10] sm:$0xff]
        %v1067 = vld [vmem:[%s490 + $0x18] sm:$0xff]
        %v1068 = vld [vmem:[%s490 + $0x20] sm:$0xff]
        %v1069 = vld [vmem:[%s490 + $0x28] sm:$0xff]
        %v1070 = vld [vmem:[%s490 + $0x30] sm:$0xff]
        %v1071 = vld [vmem:[%s490 + $0x38] sm:$0xff]
        %v1072 = vld [vmem:[%s490 + $0x40] sm:$0xff]
        %v1073 = vld [vmem:[%s490 + $0x48] sm:$0xff]
        %v1074 = vld [vmem:[%s490 + $0x50] sm:$0xff]
        %v1075 = vld [vmem:[%s490 + $0x58] sm:$0xff]
        %v1076 = vld [vmem:[%s490 + $0x60] sm:$0xff]
        %v1077 = vld [vmem:[%s490 + $0x68] sm:$0xff]
        %v1078 = vld [vmem:[%s490 + $0x70] sm:$0xff]
        %v1079 = vld [vmem:[%s490 + $0x78] sm:$0xff]
        %v1080 = vsub.f32 %v1048, %v1064
        %v1081 = vsub.f32 %v1049, %v1065
        %v1082 = vsub.f32 %v1050, %v1066
        %v1083 = vsub.f32 %v1051, %v1067
        %v1084 = vsub.f32 %v1052, %v1068
        %v1085 = vsub.f32 %v1053, %v1069
        %v1086 = vsub.f32 %v1054, %v1070
        %v1087 = vsub.f32 %v1055, %v1071
        %v1088 = vsub.f32 %v1056, %v1072
        %v1089 = vsub.f32 %v1057, %v1073
        %v1090 = vsub.f32 %v1058, %v1074
        %v1091 = vsub.f32 %v1059, %v1075
        %v1092 = vsub.f32 %v1060, %v1076
        %v1093 = vsub.f32 %v1061, %v1077
        %v1094 = vsub.f32 %v1062, %v1078
        %v1095 = vsub.f32 %v1063, %v1079
        %v1096 = vmul.f32 %v1080, %v1080
        %v1097 = vmul.f32 %v1081, %v1081
        %v1098 = vmul.f32 %v1082, %v1082
        %v1099 = vmul.f32 %v1083, %v1083
        %v1100 = vmul.f32 %v1084, %v1084
        %v1101 = vmul.f32 %v1085, %v1085
        %v1102 = vmul.f32 %v1086, %v1086
        %v1103 = vmul.f32 %v1087, %v1087
        %v1104 = vmul.f32 %v1088, %v1088
        %v1105 = vmul.f32 %v1089, %v1089
        %v1106 = vmul.f32 %v1090, %v1090
        %v1107 = vmul.f32 %v1091, %v1091
        %v1108 = vmul.f32 %v1092, %v1092
        %v1109 = vmul.f32 %v1093, %v1093
        %v1110 = vmul.f32 %v1094, %v1094
        %v1111 = vmul.f32 %v1095, %v1095
        %s1112 = sadd.s32 %s38, %s39
        %s1113 = smul.u32 %s1112, 16
        %s1114 = ssub.s32 24, %s1113
        %v1115 = vlaneseq
        %v1116 = vshrl.u32 %v1115, 7
        %v1117 = vadd.s32 %v1116, 8
        %v1118 = vstv %s1114
        %vm1119 = vcmp.lt.s32.totalorder %v1116, %v1118
        %vm1120 = vcmp.lt.s32.totalorder %v1117, %v1118
        %v1121 = vsel %vm1119, %v1096, 0.0
        %v1122 = vsel %vm1119, %v1097, 0.0
        %v1123 = vsel %vm1119, %v1098, 0.0
        %v1124 = vsel %vm1119, %v1099, 0.0
        %v1125 = vsel %vm1119, %v1100, 0.0
        %v1126 = vsel %vm1119, %v1101, 0.0
        %v1127 = vsel %vm1119, %v1102, 0.0
        %v1128 = vsel %vm1119, %v1103, 0.0
        %v1129 = vsel %vm1120, %v1104, 0.0
        %v1130 = vsel %vm1120, %v1105, 0.0
        %v1131 = vsel %vm1120, %v1106, 0.0
        %v1132 = vsel %vm1120, %v1107, 0.0
        %v1133 = vsel %vm1120, %v1108, 0.0
        %v1134 = vsel %vm1120, %v1109, 0.0
        %v1135 = vsel %vm1120, %v1110, 0.0
        %v1136 = vsel %vm1120, %v1111, 0.0
        %v1137 = vld [vmem:[#allocation2] sm:$0xff]
        %v1138 = vld [vmem:[#allocation2 + $0x8] sm:$0xff]
        %v1139 = vld [vmem:[#allocation2 + $0x10] sm:$0xff]
        %v1140 = vld [vmem:[#allocation2 + $0x18] sm:$0xff]
        %v1141 = vld [vmem:[#allocation2 + $0x20] sm:$0xff]
        %v1142 = vld [vmem:[#allocation2 + $0x28] sm:$0xff]
        %v1143 = vld [vmem:[#allocation2 + $0x30] sm:$0xff]
        %v1144 = vld [vmem:[#allocation2 + $0x38] sm:$0xff]
        %v1145 = vld [vmem:[#allocation2 + $0x40] sm:$0xff]
        %v1146 = vld [vmem:[#allocation2 + $0x48] sm:$0xff]
        %v1147 = vld [vmem:[#allocation2 + $0x50] sm:$0xff]
        %v1148 = vld [vmem:[#allocation2 + $0x58] sm:$0xff]
        %v1149 = vld [vmem:[#allocation2 + $0x60] sm:$0xff]
        %v1150 = vld [vmem:[#allocation2 + $0x68] sm:$0xff]
        %v1151 = vld [vmem:[#allocation2 + $0x70] sm:$0xff]
        %v1152 = vld [vmem:[#allocation2 + $0x78] sm:$0xff]
        %v1153 = vadd.f32 %v1137, %v1121
        %v1154 = vadd.f32 %v1138, %v1122
        %v1155 = vadd.f32 %v1139, %v1123
        %v1156 = vadd.f32 %v1140, %v1124
        %v1157 = vadd.f32 %v1141, %v1125
        %v1158 = vadd.f32 %v1142, %v1126
        %v1159 = vadd.f32 %v1143, %v1127
        %v1160 = vadd.f32 %v1144, %v1128
        %v1161 = vadd.f32 %v1145, %v1129
        %v1162 = vadd.f32 %v1146, %v1130
        %v1163 = vadd.f32 %v1147, %v1131
        %v1164 = vadd.f32 %v1148, %v1132
        %v1165 = vadd.f32 %v1149, %v1133
        %v1166 = vadd.f32 %v1150, %v1134
        %v1167 = vadd.f32 %v1151, %v1135
        %v1168 = vadd.f32 %v1152, %v1136
        %1169 = vst [vmem:[#allocation2] sm:$0xff] %v1153
        %1170 = vst [vmem:[#allocation2 + $0x8] sm:$0xff] %v1154
        %1171 = vst [vmem:[#allocation2 + $0x10] sm:$0xff] %v1155
        %1172 = vst [vmem:[#allocation2 + $0x18] sm:$0xff] %v1156
        %1173 = vst [vmem:[#allocation2 + $0x20] sm:$0xff] %v1157
        %1174 = vst [vmem:[#allocation2 + $0x28] sm:$0xff] %v1158
        %1175 = vst [vmem:[#allocation2 + $0x30] sm:$0xff] %v1159
        %1176 = vst [vmem:[#allocation2 + $0x38] sm:$0xff] %v1160
        %1177 = vst [vmem:[#allocation2 + $0x40] sm:$0xff] %v1161
        %1178 = vst [vmem:[#allocation2 + $0x48] sm:$0xff] %v1162
        %1179 = vst [vmem:[#allocation2 + $0x50] sm:$0xff] %v1163
        %1180 = vst [vmem:[#allocation2 + $0x58] sm:$0xff] %v1164
        %1181 = vst [vmem:[#allocation2 + $0x60] sm:$0xff] %v1165
        %1182 = vst [vmem:[#allocation2 + $0x68] sm:$0xff] %v1166
        %1183 = vst [vmem:[#allocation2 + $0x70] sm:$0xff] %v1167
        %1184 = vst [vmem:[#allocation2 + $0x78] sm:$0xff] %v1168
        // Predicated region
        $region113: #{tpu_custom_call.1} parent=59 // pred_check
          %p1185 = pneg %p582
        $region114: #{tpu_custom_call.1} parent=59 // pred_check_branch
          %1187 = sbr.rel (%p1185) target = $region116
        $region115: #{tpu_custom_call.1} parent=59 // pred_region
          %v1188 = vld [vmem:[#allocation2] sm:$0xff]
          %v1189 = vld [vmem:[#allocation2 + $0x8] sm:$0xff]
          %v1190 = vld [vmem:[#allocation2 + $0x10] sm:$0xff]
          %v1191 = vld [vmem:[#allocation2 + $0x18] sm:$0xff]
          %v1192 = vld [vmem:[#allocation2 + $0x20] sm:$0xff]
          %v1193 = vld [vmem:[#allocation2 + $0x28] sm:$0xff]
          %v1194 = vld [vmem:[#allocation2 + $0x30] sm:$0xff]
          %v1195 = vld [vmem:[#allocation2 + $0x38] sm:$0xff]
          %v1196 = vld [vmem:[#allocation2 + $0x40] sm:$0xff]
          %v1197 = vld [vmem:[#allocation2 + $0x48] sm:$0xff]
          %v1198 = vld [vmem:[#allocation2 + $0x50] sm:$0xff]
          %v1199 = vld [vmem:[#allocation2 + $0x58] sm:$0xff]
          %v1200 = vld [vmem:[#allocation2 + $0x60] sm:$0xff]
          %v1201 = vld [vmem:[#allocation2 + $0x68] sm:$0xff]
          %v1202 = vld [vmem:[#allocation2 + $0x70] sm:$0xff]
          %v1203 = vld [vmem:[#allocation2 + $0x78] sm:$0xff]
          %v1204 = vadd.f32 %v1188, %v1189
          %v1205 = vadd.f32 %v1204, %v1190
          %v1206 = vadd.f32 %v1205, %v1191
          %v1207 = vadd.f32 %v1206, %v1192
          %v1208 = vadd.f32 %v1207, %v1193
          %v1209 = vadd.f32 %v1208, %v1194
          %v1210 = vadd.f32 %v1209, %v1195
          %v1211 = vadd.f32 %v1210, %v1196
          %v1212 = vadd.f32 %v1211, %v1197
          %v1213 = vadd.f32 %v1212, %v1198
          %v1214 = vadd.f32 %v1213, %v1199
          %v1215 = vadd.f32 %v1214, %v1200
          %v1216 = vadd.f32 %v1215, %v1201
          %v1217 = vadd.f32 %v1216, %v1202
          %v1218 = vadd.f32 %v1217, %v1203
          %1219 = vadd.xlane.f32.xlu0 %v1218
          %v1220 = vpop.xlane.xlu0 %1219
          %v1221 = vrot.slane %v1220, 4
          %v1222 = vadd.f32 %v1220, %v1221
          %v1223 = vrot.slane %v1222, 2
          %v1224 = vadd.f32 %v1222, %v1223
          %v1225 = vrot.slane %v1224, 1
          %v1226 = vadd.f32 %v1224, %v1225
          %s1227 = vtos %v1226
          %s1228 = smul.f32 %s1227, 4.0690105e-05
          %v1229 = vlaneseq
          %v1230 = vand.u32 %v1229, 127
          %vm1231 = vcmp.eq.s32.totalorder %v1116, 0
          %vm1232 = vcmp.eq.s32.totalorder %v1230, 0
          %vm1233 = vmand %vm1231, %vm1232
          %v1234 = vstv %s1228
          %v1235 = vsel %vm1233, %v1234, 0.0
          %vm1236 = vcmp.eq.s32.totalorder %v1230, 1
          %vm1237 = vmand %vm1231, %vm1236
          %s1238 = sld [smem:[#allocation3]]
          %v1239 = vstv %s1238
          %v1240 = vsel %vm1237, %v1239, %v1235
          %vm1241 = vcmp.eq.s32.totalorder %v1230, 2
          %vm1242 = vmand %vm1231, %vm1241
          %s1243 = sld [smem:[#allocation3 + $0x1]]
          %v1244 = vstv %s1243
          %v1245 = vsel %vm1242, %v1244, %v1240
          %vm1246 = vcmp.eq.s32.totalorder %v1230, 3
          %vm1247 = vmand %vm1231, %vm1246
          %s1248 = sld [smem:[#allocation3 + $0x2]]
          %v1249 = vstv %s1248
          %v1250 = vsel %vm1247, %v1249, %v1245
          %vm1251 = vcmp.eq.s32.totalorder %v1230, 4
          %vm1252 = vmand %vm1231, %vm1251
          %s1253 = sld [smem:[#allocation3 + $0x3]]
          %v1254 = vstv %s1253
          %v1255 = vsel %vm1252, %v1254, %v1250
          %1256 = vst [vmem:[%s563] sm:$0xff] %v1255
        $region116: #{tpu_custom_call.1} parent=59 // pred_fallthru
          _
        %s1257 = sand.u32 %s286, 1
        %s1258 = scalar_lea.sflag [#allocation6], %s1257
        %s1259 = sand.u32 %s286, 1
        %s1260 = smul.addr %s1259, 8
        %s1261 = scalar_lea.vmem [#allocation21], %s1260
        // Predicated region
        $region117: #{tpu_custom_call.1} parent=59 // pred_check
          %p1262 = pneg %p296
        $region118: #{tpu_custom_call.1} parent=59 // pred_check_branch
          %1264 = sbr.rel (%p1262) target = $region120
        $region119: #{tpu_custom_call.1} parent=59 // pred_region
          %s1266 = ssub.s32 128, 128
          %1267 = vsyncadd %s1258, %s1266
          %s1268 = smul.addr %s38, 128
          %s1269 = scalar_lea.hbm %s10, %s1268
          %s1271 = sshll.u32 %s1261, 4
          %s1272 = int_to_ptr.vmem [resolvable:$true] %s1271
          %1274 = dma.vmem_to_hbm [thread:$0]  %s1272, 128, %s1269, %s1258
        $region120: #{tpu_custom_call.1} parent=59 // pred_fallthru
          _
      $region60: #{tpu_custom_call.1} parent=5 // pred_fallthru
        _
      %p1275 = scmp.le.s32.totalorder 2, %s29
      // Predicated region
      $region121: #{tpu_custom_call.1} parent=5 // pred_check
        %p1276 = pneg %p1275
      $region122: #{tpu_custom_call.1} parent=5 // pred_check_branch
        %1278 = sbr.rel (%p1276) target = $region124
      $region123: #{tpu_custom_call.1} parent=5 // pred_region
        %s1279 = ssub.s32 %s29, 2
        // Predicated region
        $region125: #{tpu_custom_call.1} parent=123 // pred_check
          %p1280 = pneg %p302
        $region126: #{tpu_custom_call.1} parent=123 // pred_check_branch
          %1282 = sbr.rel (%p1280) target = $region128
        $region127: #{tpu_custom_call.1} parent=123 // pred_region
          %s1283 = sand.u32 %s287, 1
          %s1284 = scalar_lea.sflag [#allocation6], %s1283
          %s1285 = sand.u32 %s287, 1
          %s1286 = smul.addr %s1285, 8
          %s1287 = scalar_lea.vmem [#allocation21], %s1286
          %1288 = dma.done %s1284, 128
        $region128: #{tpu_custom_call.1} parent=123 // pred_fallthru
          _
      $region124: #{tpu_custom_call.1} parent=5 // pred_fallthru
        _
    $region6: #{tpu_custom_call.1} parent=1 // loop_footer
      %s33 = sadd.s32 1, %s29
    $region7: #{tpu_custom_call.1} parent=1 // loop_footer_branch
      %28 = sbr.rel target = $region3
    $region8: #{tpu_custom_call.1} parent=1 // loop_exit
      _
    %1289 = vsyncpa [#allocation5], 1
    %s1290 = scalar_lea.sflag [#allocation5], 1
    %1291 = vsyncpa %s1290, 1
    %1292 = vsyncpa [#allocation8], 1
    %s1293 = scalar_lea.sflag [#allocation8], 1
    %1294 = vsyncpa %s1293, 1
    %1295 = vsyncpa [#allocation11], 1
    %1296 = vsyncpa [#allocation14], 1
    %1297 = vsyncpa [#allocation17], 1
    %1298 = vsyncpa [#allocation20], 1
    %1299 = vsyncpa [#allocation6], 1
    %s1300 = scalar_lea.sflag [#allocation6], 1
    %1301 = vsyncpa %s1300, 1

</llo_original>
